<compile_context>
chip_gen: v7x
topology: tpu7x:2x2x1
jax: 0.10.0
libtpu: 0.0.40
codegen_flags: <defaults>
</compile_context>

<pallas_src>
import functools

import jax
import jax.numpy as jnp
from jax import lax
from jax.experimental import pallas as pl
from jax.experimental.pallas import tpu as pltpu

EPS = 1e-5  # nn.LayerNorm default eps


def _layer_norm(x, g, b):
    mu = jnp.mean(x, axis=-1, keepdims=True)
    var = jnp.mean((x - mu) ** 2, axis=-1, keepdims=True)
    return (x - mu) * lax.rsqrt(var + EPS) * g + b


# --------------------------------------------------------------------------
# Stage 1: LayerNorm + fused QKV projection.  grid = (B, L // tl)
# --------------------------------------------------------------------------
def _ln_qkv_kernel(x_ref, g_ref, b_ref, wqkv_ref, bqkv_ref, qkv_ref):
    xn = _layer_norm(x_ref[0].astype(jnp.float32), g_ref[0], b_ref[0])
    acc = jnp.dot(xn.astype(wqkv_ref.dtype), wqkv_ref[...],
                  preferred_element_type=jnp.float32) + bqkv_ref[0]
    qkv_ref[0] = acc.astype(qkv_ref.dtype)


# --------------------------------------------------------------------------
# Stage 2: causal flash attention.  grid = (B, H, L//tq, L//tkv)
#   q/k/v laid out (B, H, L, dh); online softmax over the kv axis.
# --------------------------------------------------------------------------
def _flash_attn_kernel(q_ref, k_ref, v_ref, o_ref, m_sc, l_sc, acc_sc, *, tq, tkv):
    qi = pl.program_id(2)
    ki = pl.program_id(3)

    @pl.when(ki == 0)
    def _init():
        m_sc[...] = jnp.full_like(m_sc, -jnp.inf)
        l_sc[...] = jnp.zeros_like(l_sc)
        acc_sc[...] = jnp.zeros_like(acc_sc)

    q_start = qi * tq
    kv_start = ki * tkv

    # Skip KV tiles that are entirely in the future of this query tile (causal).
    @pl.when(kv_start <= q_start + (tq - 1))
    def _compute():
        q = q_ref[0, 0]   # (tq, dh) — query scale already folded into Wq
        k = k_ref[0, 0]   # (tkv, dh)
        v = v_ref[0, 0]   # (tkv, dh)

        # q @ k^T without an explicit transpose (contract dh against dh).
        s = lax.dot_general(q, k, (((1,), (1,)), ((), ())),
                            preferred_element_type=jnp.float32)       # (tq, tkv)

        # In-kernel causal mask — no (L, L) mask tensor is ever DMA'd.
        row = q_start + lax.broadcasted_iota(jnp.int32, (tq, tkv), 0)
        col = kv_start + lax.broadcasted_iota(jnp.int32, (tq, tkv), 1)
        s = jnp.where(col > row, jnp.float32(-1e9), s)

        m_prev = m_sc[...]
        m_new = jnp.maximum(m_prev, jnp.max(s, axis=-1, keepdims=True))
        alpha = jnp.exp(m_prev - m_new)
        p = jnp.exp(s - m_new)
        l_sc[...] = alpha * l_sc[...] + jnp.sum(p, axis=-1, keepdims=True)
        acc_sc[...] = alpha * acc_sc[...] + lax.dot_general(
            p.astype(v.dtype), v, (((1,), (0,)), ((), ())),
            preferred_element_type=jnp.float32)
        m_sc[...] = m_new

    @pl.when(ki == pl.num_programs(3) - 1)
    def _finalize():
        inv_l = pl.reciprocal(l_sc[...], approx=True)   # EUP, off the VALU slot
        o_ref[0, 0] = (acc_sc[...] * inv_l).astype(o_ref.dtype)


# --------------------------------------------------------------------------
# Stage 3: out-projection + residual + LayerNorm2 + d_ff-tiled FFN + residual.
#   grid = (B, L//tl, d_ff//tff); last axis accumulates into VMEM scratch.
# --------------------------------------------------------------------------
def _proj_ffn_kernel(x_ref, ctx_ref, wo_ref, bo_ref, g_ref, b_ref,
                     w1_ref, b1_ref, w2_ref, b2_ref, out_ref,
                     x1_sc, yn_sc, acc_sc):
    fi = pl.program_id(2)

    @pl.when(fi == 0)
    def _init():
        attn = jnp.dot(ctx_ref[0], wo_ref[...],
                       preferred_element_type=jnp.float32) + bo_ref[0]
        x1 = x_ref[0].astype(jnp.float32) + attn          # residual after attention
        x1_sc[...] = x1
        yn_sc[...] = _layer_norm(x1, g_ref[0], b_ref[0])  # preprocess_ffn
        acc_sc[...] = jnp.zeros_like(acc_sc)

    # One d_ff tile: relu(yn @ W1_tile + b1_tile) @ W2_tile, accumulated in f32.
    hid = jnp.dot(yn_sc[...].astype(w1_ref.dtype), w1_ref[...],
                  preferred_element_type=jnp.float32) + b1_ref[0]
    hid = jnp.maximum(hid, 0.0)
    acc_sc[...] += jnp.dot(hid.astype(w2_ref.dtype), w2_ref[...],
                           preferred_element_type=jnp.float32)

    @pl.when(fi == pl.num_programs(2) - 1)
    def _finalize():
        out_ref[0] = (x1_sc[...] + acc_sc[...] + b2_ref[0]).astype(out_ref.dtype)


# --------------------------------------------------------------------------
# Wrapper
# --------------------------------------------------------------------------
def lm_decoder_layer(x, params, *, n_heads, tq=128, tkv=128, tl=128, tff=512,
                     matmul_dtype=jnp.float32):
    """x: (B, L, D) float32. Causal (LM) self-attention; mask built in-kernel."""
    B, L, D = x.shape
    assert D % n_heads == 0, "d_model must be divisible by n_heads"
    dh = D // n_heads
    d_ff = params["w1"].shape[1]

    tq, tkv, tl, tff = min(tq, L), min(tkv, L), min(tl, L), min(tff, d_ff)
    assert L % tq == 0 and L % tkv == 0 and L % tl == 0 and d_ff % tff == 0
    assert tq % 8 == 0 and tkv % 8 == 0 and tl % 8 == 0
    assert (tff % 128 == 0) or (tff == d_ff)

    f32 = jnp.float32
    scale = f32(1.0 / (dh ** 0.5))
    # Fold 1/sqrt(d_head) into the query projection; fuse Wq|Wk|Wv into one matmul.
    wqkv = jnp.concatenate([params["wq"] * scale, params["wk"], params["wv"]],
                           axis=1).astype(matmul_dtype)
    bqkv = jnp.concatenate([params["bq"] * scale, params["bk"], params["bv"]],
                           axis=1).astype(f32)
    wo = params["wo"].astype(matmul_dtype)
    w1 = params["w1"].astype(matmul_dtype)
    w2 = params["w2"].astype(matmul_dtype)

    item = jnp.dtype(matmul_dtype).itemsize
    n_l = L // tl

    # ---- Stage 1: LN1 + QKV projection -----------------------------------
    qkv = pl.pallas_call(
        _ln_qkv_kernel,
        out_shape=jax.ShapeDtypeStruct((B, L, 3 * D), matmul_dtype),
        grid=(B, n_l),
        in_specs=[
            pl.BlockSpec((1, tl, D), lambda b, i: (b, i, 0)),       # x tile
            pl.BlockSpec((1, D), lambda b, i: (0, 0)),              # ln1_g
            pl.BlockSpec((1, D), lambda b, i: (0, 0)),              # ln1_b
            pl.BlockSpec((D, 3 * D), lambda b, i: (0, 0)),          # fused Wqkv
            pl.BlockSpec((1, 3 * D), lambda b, i: (0, 0)),          # fused bqkv
        ],
        out_specs=pl.BlockSpec((1, tl, 3 * D), lambda b, i: (b, i, 0)),
        compiler_params=pltpu.CompilerParams(
            dimension_semantics=("parallel", "parallel"),
            vmem_limit_bytes=32 * 1024 * 1024),
        cost_estimate=pl.CostEstimate(
            flops=2 * B * L * D * 3 * D,
            transcendentals=B * L,
            bytes_accessed=B * L * D * 4 + B * L * 3 * D * item + 3 * D * D * item),
    )(x, params["ln1_g"], params["ln1_b"], wqkv, bqkv)

    # Layout plumbing (plain XLA): split heads so attention tiles are (tq, dh)
    # with dh as the full minor dimension of the array.
    qkv_h = qkv.reshape(B, L, 3, n_heads, dh).transpose(2, 0, 3, 1, 4)  # (3,B,H,L,dh)
    q_h, k_h, v_h = qkv_h[0], qkv_h[1], qkv_h[2]

    n_q = L // tq
    n_kv = L // tkv

    def q_index(b, h, qi, ki):
        return (b, h, qi, 0)

    def kv_index(b, h, qi, ki):
        # Clamp fully-future KV tiles (whose compute is skipped) to the last
        # useful block so the pipeline does not issue wasted DMAs.
        ki_max = (qi * tq + (tq - 1)) // tkv
        return (b, h, jnp.minimum(ki, ki_max), 0)

    # ---- Stage 2: causal flash attention ----------------------------------
    ctx_h = pl.pallas_call(
        functools.partial(_flash_attn_kernel, tq=tq, tkv=tkv),
        out_shape=jax.ShapeDtypeStruct((B, n_heads, L, dh), matmul_dtype),
        grid=(B, n_heads, n_q, n_kv),
        in_specs=[
            pl.BlockSpec((1, 1, tq, dh), q_index),
            pl.BlockSpec((1, 1, tkv, dh), kv_index),
            pl.BlockSpec((1, 1, tkv, dh), kv_index),
        ],
        out_specs=pl.BlockSpec((1, 1, tq, dh), q_index),
        scratch_shapes=[
            pltpu.VMEM((tq, 1), jnp.float32),    # running max m
            pltpu.VMEM((tq, 1), jnp.float32),    # running denom l
            pltpu.VMEM((tq, dh), jnp.float32),   # running acc
        ],
        compiler_params=pltpu.CompilerParams(
            dimension_semantics=("parallel", "parallel", "parallel", "arbitrary"),
            vmem_limit_bytes=32 * 1024 * 1024),
        cost_estimate=pl.CostEstimate(
            flops=2 * B * n_heads * L * L * dh,          # ~causal half of 4*L^2*dh
            transcendentals=B * n_heads * L * L // 2,
            bytes_accessed=4 * B * L * D * item),
    )(q_h, k_h, v_h)

    ctx = ctx_h.transpose(0, 2, 1, 3).reshape(B, L, D)   # back to (B, L, D)

    # ---- Stage 3: Wo + residual + LN2 + d_ff-tiled FFN + residual ----------
    n_ff = d_ff // tff
    out = pl.pallas_call(
        _proj_ffn_kernel,
        out_shape=jax.ShapeDtypeStruct((B, L, D), x.dtype),
        grid=(B, n_l, n_ff),
        in_specs=[
            pl.BlockSpec((1, tl, D), lambda b, i, f: (b, i, 0)),    # x
            pl.BlockSpec((1, tl, D), lambda b, i, f: (b, i, 0)),    # ctx
            pl.BlockSpec((D, D), lambda b, i, f: (0, 0)),           # wo
            pl.BlockSpec((1, D), lambda b, i, f: (0, 0)),           # bo
            pl.BlockSpec((1, D), lambda b, i, f: (0, 0)),           # ln2_g
            pl.BlockSpec((1, D), lambda b, i, f: (0, 0)),           # ln2_b
            pl.BlockSpec((D, tff), lambda b, i, f: (0, f)),         # w1 tile
            pl.BlockSpec((1, tff), lambda b, i, f: (0, f)),         # b1 tile
            pl.BlockSpec((tff, D), lambda b, i, f: (f, 0)),         # w2 tile
            pl.BlockSpec((1, D), lambda b, i, f: (0, 0)),           # b2
        ],
        out_specs=pl.BlockSpec((1, tl, D), lambda b, i, f: (b, i, 0)),
        scratch_shapes=[
            pltpu.VMEM((tl, D), jnp.float32),    # x1 (attention residual)
            pltpu.VMEM((tl, D), jnp.float32),    # LayerNorm2 output
            pltpu.VMEM((tl, D), jnp.float32),    # FFN accumulator
        ],
        compiler_params=pltpu.CompilerParams(
            dimension_semantics=("parallel", "parallel", "arbitrary"),
            vmem_limit_bytes=32 * 1024 * 1024),
        cost_estimate=pl.CostEstimate(
            flops=2 * B * L * D * D + 4 * B * L * D * d_ff,
            transcendentals=B * L,
            bytes_accessed=(2 * B * L * D) * 4 + (D * D + 2 * D * d_ff) * item),
    )(x, ctx, wo, params["bo"], params["ln2_g"], params["ln2_b"],
      w1, params["b1"], w2, params["b2"])

    return out


# --------------------------------------------------------------------------
# Pure-JAX reference (identical math) for correctness checking
# --------------------------------------------------------------------------
def _reference(x, params, *, n_heads):
    B, L, D = x.shape
    dh = D // n_heads

    def ln(v, g, b):
        mu = jnp.mean(v, -1, keepdims=True)
        var = jnp.mean((v - mu) ** 2, -1, keepdims=True)
        return (v - mu) / jnp.sqrt(var + EPS) * g + b

    xn = ln(x, params["ln1_g"][0], params["ln1_b"][0])
    q = xn @ params["wq"] + params["bq"][0]
    k = xn @ params["wk"] + params["bk"][0]
    v = xn @ params["wv"] + params["bv"][0]
    q = q.reshape(B, L, n_heads, dh).transpose(0, 2, 1, 3) * (dh ** -0.5)
    k = k.reshape(B, L, n_heads, dh).transpose(0, 2, 1, 3)
    v = v.reshape(B, L, n_heads, dh).transpose(0, 2, 1, 3)
    s = jnp.einsum("bhqd,bhkd->bhqk", q, k)
    causal = jnp.arange(L)[None, :] > jnp.arange(L)[:, None]
    s = jnp.where(causal[None, None, :, :], -1e9, s)
    p = jax.nn.softmax(s, axis=-1)
    ctx = jnp.einsum("bhqk,bhkd->bhqd", p, v).transpose(0, 2, 1, 3).reshape(B, L, D)
    x1 = x + (ctx @ params["wo"] + params["bo"][0])
    yn = ln(x1, params["ln2_g"][0], params["ln2_b"][0])
    ff = jnp.maximum(yn @ params["w1"] + params["b1"][0], 0.0) @ params["w2"] + params["b2"][0]
    return x1 + ff


def make_params(key, d_model, d_ff):
    ks = jax.random.split(key, 8)
    std = 0.05
    return {
        "ln1_g": jnp.ones((1, d_model), jnp.float32),
        "ln1_b": jnp.zeros((1, d_model), jnp.float32),
        "wq": std * jax.random.normal(ks[0], (d_model, d_model), jnp.float32),
        "bq": jnp.zeros((1, d_model), jnp.float32),
        "wk": std * jax.random.normal(ks[1], (d_model, d_model), jnp.float32),
        "bk": jnp.zeros((1, d_model), jnp.float32),
        "wv": std * jax.random.normal(ks[2], (d_model, d_model), jnp.float32),
        "bv": jnp.zeros((1, d_model), jnp.float32),
        "wo": std * jax.random.normal(ks[3], (d_model, d_model), jnp.float32),
        "bo": jnp.zeros((1, d_model), jnp.float32),
        "ln2_g": jnp.ones((1, d_model), jnp.float32),
        "ln2_b": jnp.zeros((1, d_model), jnp.float32),
        "w1": std * jax.random.normal(ks[4], (d_model, d_ff), jnp.float32),
        "b1": jnp.zeros((1, d_ff), jnp.float32),
        "w2": std * jax.random.normal(ks[5], (d_ff, d_model), jnp.float32),
        "b2": jnp.zeros((1, d_model), jnp.float32),
    }


if __name__ == "__main__":
    # Small but lane-dense config (D multiple of 128) that still exercises
    # q/kv tiling, the causal skip and the d_ff accumulation axis.
    B, L, D, H, D_FF = 2, 256, 256, 4, 1024

    key = jax.random.PRNGKey(0)
    k_x, k_p = jax.random.split(key)
    x = jax.random.normal(k_x, (B, L, D), jnp.float32)
    params = make_params(k_p, D, D_FF)

    # f32 matmul operands — tight check (tolerance covers the approx EUP reciprocal).
    out = jax.block_until_ready(lm_decoder_layer(x, params, n_heads=H))
    ref = _reference(x, params, n_heads=H)
    assert out.shape == (B, L, D)
    assert jnp.allclose(out, ref, rtol=5e-3, atol=5e-3), "f32 mismatch vs JAX reference"

    # bf16 matmul operands (f32 accumulation & f32 LayerNorm/softmax) — sanity check.
    out_bf16 = jax.block_until_ready(
        lm_decoder_layer(x, params, n_heads=H, matmul_dtype=jnp.bfloat16))
    assert jnp.allclose(out_bf16, ref, rtol=1e-1, atol=1e-1), "bf16 sanity mismatch"

    print("KERNEL_OK")
</pallas_src>

<mosaic_0001>
module attributes {stable_mosaic.version = 11 : i64} {
  func.func @_ln_qkv_kernel(%arg0: i32, %arg1: i32, %arg2: memref<1x128x256xf32, #tpu.memory_space<vmem>>, %arg3: memref<1x256xf32, #tpu.memory_space<vmem>>, %arg4: memref<1x256xf32, #tpu.memory_space<vmem>>, %arg5: memref<256x768xf32, #tpu.memory_space<vmem>>, %arg6: memref<1x768xf32, #tpu.memory_space<vmem>>, %arg7: memref<1x128x768xf32, #tpu.memory_space<vmem>>) attributes {dimension_semantics = [#tpu.dimension_semantics<parallel>, #tpu.dimension_semantics<parallel>], iteration_bounds = array<i64: 2, 2>, scalar_prefetch = 0 : i64, scratch_operands = 0 : i64, tpu.core_type = #tpu.core_type<tc>, window_params = [{transform_indices = @transform_0, window_bounds = array<i64: 1, 128, 256>}, {pipeline_mode = #tpu.pipeline_mode<synchronous>, transform_indices = @transform_1, window_bounds = array<i64: 1, 256>}, {pipeline_mode = #tpu.pipeline_mode<synchronous>, transform_indices = @transform_2, window_bounds = array<i64: 1, 256>}, {pipeline_mode = #tpu.pipeline_mode<synchronous>, transform_indices = @transform_3, window_bounds = array<i64: 256, 768>}, {pipeline_mode = #tpu.pipeline_mode<synchronous>, transform_indices = @transform_4, window_bounds = array<i64: 1, 768>}, {transform_indices = @transform_5, window_bounds = array<i64: 1, 128, 768>}]} {
    %c0 = arith.constant 0 : index
    %c0_0 = arith.constant 0 : index
    %c0_1 = arith.constant 0 : index
    %0 = vector.load %arg2[%c0, %c0_0, %c0_1] : memref<1x128x256xf32, #tpu.memory_space<vmem>>, vector<1x128x256xf32>
    %1 = vector.shape_cast %0 : vector<1x128x256xf32> to vector<128x256xf32>
    %c0_2 = arith.constant 0 : index
    %c0_3 = arith.constant 0 : index
    %2 = vector.load %arg3[%c0_2, %c0_3] : memref<1x256xf32, #tpu.memory_space<vmem>>, vector<1x256xf32>
    %3 = vector.shape_cast %2 : vector<1x256xf32> to vector<256xf32>
    %c0_4 = arith.constant 0 : index
    %c0_5 = arith.constant 0 : index
    %4 = vector.load %arg4[%c0_4, %c0_5] : memref<1x256xf32, #tpu.memory_space<vmem>>, vector<1x256xf32>
    %5 = vector.shape_cast %4 : vector<1x256xf32> to vector<256xf32>
    %cst = arith.constant dense<0.000000e+00> : vector<128xf32>
    %6 = vector.multi_reduction <add>, %1, %cst [1] : vector<128x256xf32> to vector<128xf32>
    %7 = vector.shape_cast %6 : vector<128xf32> to vector<128x1xf32>
    %cst_6 = arith.constant 2.560000e+02 : f32
    %8 = vector.broadcast %cst_6 : f32 to vector<128x1xf32>
    %9 = arith.divf %7, %8 : vector<128x1xf32>
    %10 = vector.broadcast %9 : vector<128x1xf32> to vector<128x256xf32>
    %11 = arith.subf %1, %10 : vector<128x256xf32>
    %12 = arith.mulf %11, %11 : vector<128x256xf32>
    %cst_7 = arith.constant dense<0.000000e+00> : vector<128xf32>
    %13 = vector.multi_reduction <add>, %12, %cst_7 [1] : vector<128x256xf32> to vector<128xf32>
    %14 = vector.shape_cast %13 : vector<128xf32> to vector<128x1xf32>
    %cst_8 = arith.constant 2.560000e+02 : f32
    %15 = vector.broadcast %cst_8 : f32 to vector<128x1xf32>
    %16 = arith.divf %14, %15 : vector<128x1xf32>
    %17 = vector.broadcast %9 : vector<128x1xf32> to vector<128x256xf32>
    %18 = arith.subf %1, %17 : vector<128x256xf32>
    %cst_9 = arith.constant 9.99999974E-6 : f32
    %19 = vector.broadcast %cst_9 : f32 to vector<128x1xf32>
    %20 = arith.addf %16, %19 : vector<128x1xf32>
    %21 = math.rsqrt %20 : vector<128x1xf32>
    %22 = vector.broadcast %21 : vector<128x1xf32> to vector<128x256xf32>
    %23 = arith.mulf %18, %22 : vector<128x256xf32>
    %24 = vector.shape_cast %3 : vector<256xf32> to vector<1x256xf32>
    %25 = vector.broadcast %24 : vector<1x256xf32> to vector<128x256xf32>
    %26 = arith.mulf %23, %25 : vector<128x256xf32>
    %27 = vector.shape_cast %5 : vector<256xf32> to vector<1x256xf32>
    %28 = vector.broadcast %27 : vector<1x256xf32> to vector<128x256xf32>
    %29 = arith.addf %26, %28 : vector<128x256xf32>
    %c0_10 = arith.constant 0 : index
    %c0_11 = arith.constant 0 : index
    %30 = vector.load %arg5[%c0_10, %c0_11] : memref<256x768xf32, #tpu.memory_space<vmem>>, vector<256x768xf32>
    %cst_12 = arith.constant dense<0.000000e+00> : vector<128x768xf32>
    %31 = tpu.matmul %29, %30, %cst_12 {dimension_numbers = #tpu.dot_dimension_numbers<[1], [0], [0], [1], [0, 0, 1, 1], [], []>} : vector<128x256xf32>, vector<256x768xf32>, vector<128x768xf32> -> vector<128x768xf32>
    %c0_13 = arith.constant 0 : index
    %c0_14 = arith.constant 0 : index
    %32 = vector.load %arg6[%c0_13, %c0_14] : memref<1x768xf32, #tpu.memory_space<vmem>>, vector<1x768xf32>
    %33 = vector.shape_cast %32 : vector<1x768xf32> to vector<768xf32>
    %34 = vector.shape_cast %33 : vector<768xf32> to vector<1x768xf32>
    %35 = vector.broadcast %34 : vector<1x768xf32> to vector<128x768xf32>
    %36 = arith.addf %31, %35 : vector<128x768xf32>
    %c0_15 = arith.constant 0 : index
    %c0_16 = arith.constant 0 : index
    %c0_17 = arith.constant 0 : index
    %37 = vector.load %arg7[%c0_15, %c0_16, %c0_17] : memref<1x128x768xf32, #tpu.memory_space<vmem>>, vector<1x128x768xf32>
    %38 = vector.shape_cast %37 : vector<1x128x768xf32> to vector<128x768xf32>
    %39 = vector.shape_cast %36 : vector<128x768xf32> to vector<1x128x768xf32>
    tpu.vector_store %arg7[%c0_15, %c0_16, %c0_17], %39 {strides = array<i32>} : memref<1x128x768xf32, #tpu.memory_space<vmem>>, vector<1x128x768xf32>,
    return
  }
  func.func @transform_0(%arg0: i32, %arg1: i32) -> (i32, i32, i32) {
    %c0_i32 = arith.constant 0 : i32
    %c0_i32_0 = arith.constant 0 : i32
    return %arg0, %arg1, %c0_i32 : i32, i32, i32
  }
  func.func @transform_1(%arg0: i32, %arg1: i32) -> (i32, i32) {
    %c0_i32 = arith.constant 0 : i32
    %c0_i32_0 = arith.constant 0 : i32
    %c0_i32_1 = arith.constant 0 : i32
    return %c0_i32, %c0_i32_0 : i32, i32
  }
  func.func @transform_2(%arg0: i32, %arg1: i32) -> (i32, i32) {
    %c0_i32 = arith.constant 0 : i32
    %c0_i32_0 = arith.constant 0 : i32
    %c0_i32_1 = arith.constant 0 : i32
    return %c0_i32, %c0_i32_0 : i32, i32
  }
  func.func @transform_3(%arg0: i32, %arg1: i32) -> (i32, i32) {
    %c0_i32 = arith.constant 0 : i32
    %c0_i32_0 = arith.constant 0 : i32
    %c0_i32_1 = arith.constant 0 : i32
    return %c0_i32, %c0_i32_0 : i32, i32
  }
  func.func @transform_4(%arg0: i32, %arg1: i32) -> (i32, i32) {
    %c0_i32 = arith.constant 0 : i32
    %c0_i32_0 = arith.constant 0 : i32
    %c0_i32_1 = arith.constant 0 : i32
    return %c0_i32, %c0_i32_0 : i32, i32
  }
  func.func @transform_5(%arg0: i32, %arg1: i32) -> (i32, i32, i32) {
    %c0_i32 = arith.constant 0 : i32
    %c0_i32_0 = arith.constant 0 : i32
    return %arg0, %arg1, %c0_i32 : i32, i32, i32
  }
}

</mosaic_0001>

<llo_original>
// kernel: tpu_custom_call.1
$region0: #{tpu_custom_call.1}
  #allocation0 [shape = 'u32[]', space=smem, size = 0x4, offset = 0x4, fixed_abs, tag = 'smem constant byte address 0x4 - core index']
  #allocation1 [shape = 'u32[144,128]{1,0:T(1,128)}', space=vmem, size = 0x12000, scoped, tag = 'internal scratch']
  %s0 = inlined_call_operand.hbm [shape: f32[2,256,256], index: 0, kind: input, shape index: {}]
  %s1 = inlined_call_operand.hbm [shape: f32[1,256], index: 1, kind: input, shape index: {}]
  %s2 = inlined_call_operand.hbm [shape: f32[1,256], index: 2, kind: input, shape index: {}]
  %s3 = inlined_call_operand.hbm [shape: f32[256,768], index: 3, kind: input, shape index: {}]
  %s4 = inlined_call_operand.hbm [shape: f32[1,768], index: 4, kind: input, shape index: {}]
  %s5 = inlined_call_operand.hbm [shape: f32[2,256,768], index: 5, kind: output, shape index: {}]
  %s6 = sld [smem:[#allocation0]]
  $region73: #{tpu_custom_call.1} parent=0
    _
  %s8 = ssub.s32 1, %s6
  %s9 = scalar_select 0, %s8, %s6
  $region1: #{tpu_custom_call.1} parent=0
    #allocation2 [shape = 'u8[262144]{0}', space=vmem, size = 0x40000, scoped, tag = 'input window, operand 0']
    #allocation3 [shape = 's32[2]{0}', space=sflag, size = 0x8, scoped, tag = 'scoped memory for tpu_custom_call.1']
    #allocation4 [shape = 's32[2]{0}', space=sflag, size = 0x8, scoped, tag = 'scoped memory for tpu_custom_call.1']
    #allocation5 [shape = 'u8[1024]{0}', space=vmem, size = 0x400, scoped, tag = 'input window, operand 1, single buffered']
    #allocation6 [shape = 's32[1]{0}', space=sflag, size = 0x4, scoped, tag = 'scoped memory for tpu_custom_call.1']
    #allocation7 [shape = 'u8[1024]{0}', space=vmem, size = 0x400, scoped, tag = 'input window, operand 2, single buffered']
    #allocation8 [shape = 'u8[786432]{0}', space=vmem, size = 0xc0000, scoped, tag = 'input window, operand 3, single buffered']
    #allocation9 [shape = 's32[1]{0}', space=sflag, size = 0x4, scoped, tag = 'scoped memory for tpu_custom_call.1']
    #allocation10 [shape = 'u8[3072]{0}', space=vmem, size = 0xc00, scoped, tag = 'input window, operand 4, single buffered']
    #allocation11 [shape = 'u8[786432]{0}', space=vmem, size = 0xc0000, scoped, tag = 'output window, operand 0']
    %10 = vsyncpa [#allocation3], 0
    %s11 = scalar_lea.sflag [#allocation3], 1
    %12 = vsyncpa %s11, 0
    %13 = vsyncpa [#allocation6], 0
    %14 = vsyncpa [#allocation9], 0
    %15 = vsyncpa [#allocation4], 0
    %s16 = scalar_lea.sflag [#allocation4], 1
    %17 = vsyncpa %s16, 0
    loop: start=0, step=1, limit=6
    $region2: #{tpu_custom_call.1} parent=1 // loop_pre_header
      _
    $region3: #{tpu_custom_call.1} parent=1 // loop_header
      %s19 = sphi 0, %s23
      %p20 = scmp.ge.s32.totalorder %s19, 6
      %s26 = sphi 0, %s38
      %s27 = sphi 0, %s34
      %s28 = sphi 0, %s26
      %s29 = sphi 0, %s27
      %s30 = sphi 0, %s28
      %s31 = sphi 0, %s29
      %s43 = sphi 0, %s45
      %s46 = sphi 0, %s43
      %s47 = sphi 0, %s46
      %s63 = sphi 0, %s47
      %s67 = sphi 0, %s67
      %s69 = sphi 0, %s67
      %s70 = sphi 0, %s69
      %s84 = sphi 0, %s70
      %s88 = sphi 0, %s88
      %s90 = sphi 0, %s88
      %s91 = sphi 0, %s90
      %s105 = sphi 0, %s91
      %s109 = sphi 0, %s109
      %s111 = sphi 0, %s109
      %s112 = sphi 0, %s111
      %s126 = sphi 0, %s112
      %s130 = sphi 0, %s130
      %s132 = sphi 0, %s130
      %s133 = sphi 0, %s132
      %s147 = sphi 0, %s133
      %s155 = sphi 0, %s157
      %s158 = sphi 0, %s155
      %s159 = sphi 0, %s158
      %s175 = sphi 0, %s159
    $region4: #{tpu_custom_call.1} parent=1 // loop_header_branch
      %22 = sbr.rel (%p20) target = $region8
    $region5: #{tpu_custom_call.1} parent=1 // loop_body
      %s24 = ssub.s32 %s19, 1
      %s25 = ssub.s32 %s19, 2
      %s32 = sadd.s32 1, %s27
      %p33 = scmp.ge.s32.totalorder %s32, 2
      %s34 = scalar_select %p33, 0, %s32
      %s35 = sadd.s32 1, %s26
      %s36 = scalar_select %p33, %s35, %s26
      %p37 = scmp.ge.s32.totalorder %s36, 2
      %s38 = scalar_select %p37, 0, %s36
      %s39 = ssub.s32 %s26, %s38
      %s40 = ssub.s32 %s27, %s34
      %s41 = sor.u32 %s39, %s40
      %p42 = scmp.eq.s32.totalorder %s41, 0
      %s44 = sadd.s32 %s43, 1
      %s45 = scalar_select %p42, %s43, %s44
      %p48 = pneg %p42
      %p49 = scmp.eq.s32.totalorder %s19, 3
      %p50 = por %p48, %p49
      %p51 = scmp.ne.s32.totalorder %s43, %s46
      %p52 = scmp.eq.s32.totalorder %s19, 0
      %p53 = por %p51, %p52
      %p54 = scmp.ne.s32.totalorder %s43, %s46
      %p55 = scmp.eq.s32.totalorder %s24, 3
      %p56 = por %p54, %p55
      %p57 = scmp.ne.s32.totalorder %s46, %s47
      %p58 = scmp.eq.s32.totalorder %s24, 0
      %p59 = por %p57, %p58
      %p60 = scmp.ne.s32.totalorder %s46, %s47
      %p61 = scmp.eq.s32.totalorder %s25, 3
      %p62 = por %p60, %p61
      %p64 = scmp.ne.s32.totalorder %s47, %s63
      %p65 = scmp.eq.s32.totalorder %s25, 0
      %p66 = por %p64, %p65
      %s68 = sadd.s32 %s67, 1
      %p71 = scmp.eq.s32.totalorder %s19, 3
      %p72 = scmp.ne.s32.totalorder %s67, %s69
      %p73 = scmp.eq.s32.totalorder %s19, 0
      %p74 = por %p72, %p73
      %p75 = scmp.ne.s32.totalorder %s67, %s69
      %p76 = scmp.eq.s32.totalorder %s24, 3
      %p77 = por %p75, %p76
      %p78 = scmp.ne.s32.totalorder %s69, %s70
      %p79 = scmp.eq.s32.totalorder %s24, 0
      %p80 = por %p78, %p79
      %p81 = scmp.ne.s32.totalorder %s69, %s70
      %p82 = scmp.eq.s32.totalorder %s25, 3
      %p83 = por %p81, %p82
      %p85 = scmp.ne.s32.totalorder %s70, %s84
      %p86 = scmp.eq.s32.totalorder %s25, 0
      %p87 = por %p85, %p86
      %s89 = sadd.s32 %s88, 1
      %p92 = scmp.eq.s32.totalorder %s19, 3
      %p93 = scmp.ne.s32.totalorder %s88, %s90
      %p94 = scmp.eq.s32.totalorder %s19, 0
      %p95 = por %p93, %p94
      %p96 = scmp.ne.s32.totalorder %s88, %s90
      %p97 = scmp.eq.s32.totalorder %s24, 3
      %p98 = por %p96, %p97
      %p99 = scmp.ne.s32.totalorder %s90, %s91
      %p100 = scmp.eq.s32.totalorder %s24, 0
      %p101 = por %p99, %p100
      %p102 = scmp.ne.s32.totalorder %s90, %s91
      %p103 = scmp.eq.s32.totalorder %s25, 3
      %p104 = por %p102, %p103
      %p106 = scmp.ne.s32.totalorder %s91, %s105
      %p107 = scmp.eq.s32.totalorder %s25, 0
      %p108 = por %p106, %p107
      %s110 = sadd.s32 %s109, 1
      %p113 = scmp.eq.s32.totalorder %s19, 3
      %p114 = scmp.ne.s32.totalorder %s109, %s111
      %p115 = scmp.eq.s32.totalorder %s19, 0
      %p116 = por %p114, %p115
      %p117 = scmp.ne.s32.totalorder %s109, %s111
      %p118 = scmp.eq.s32.totalorder %s24, 3
      %p119 = por %p117, %p118
      %p120 = scmp.ne.s32.totalorder %s111, %s112
      %p121 = scmp.eq.s32.totalorder %s24, 0
      %p122 = por %p120, %p121
      %p123 = scmp.ne.s32.totalorder %s111, %s112
      %p124 = scmp.eq.s32.totalorder %s25, 3
      %p125 = por %p123, %p124
      %p127 = scmp.ne.s32.totalorder %s112, %s126
      %p128 = scmp.eq.s32.totalorder %s25, 0
      %p129 = por %p127, %p128
      %s131 = sadd.s32 %s130, 1
      %p134 = scmp.eq.s32.totalorder %s19, 3
      %p135 = scmp.ne.s32.totalorder %s130, %s132
      %p136 = scmp.eq.s32.totalorder %s19, 0
      %p137 = por %p135, %p136
      %p138 = scmp.ne.s32.totalorder %s130, %s132
      %p139 = scmp.eq.s32.totalorder %s24, 3
      %p140 = por %p138, %p139
      %p141 = scmp.ne.s32.totalorder %s132, %s133
      %p142 = scmp.eq.s32.totalorder %s24, 0
      %p143 = por %p141, %p142
      %p144 = scmp.ne.s32.totalorder %s132, %s133
      %p145 = scmp.eq.s32.totalorder %s25, 3
      %p146 = por %p144, %p145
      %p148 = scmp.ne.s32.totalorder %s133, %s147
      %p149 = scmp.eq.s32.totalorder %s25, 0
      %p150 = por %p148, %p149
      %s151 = ssub.s32 %s26, %s38
      %s152 = ssub.s32 %s27, %s34
      %s153 = sor.u32 %s151, %s152
      %p154 = scmp.eq.s32.totalorder %s153, 0
      %s156 = sadd.s32 %s155, 1
      %s157 = scalar_select %p154, %s155, %s156
      %p160 = pneg %p154
      %p161 = scmp.eq.s32.totalorder %s19, 3
      %p162 = por %p160, %p161
      %p163 = scmp.ne.s32.totalorder %s155, %s158
      %p164 = scmp.eq.s32.totalorder %s19, 0
      %p165 = por %p163, %p164
      %p166 = scmp.ne.s32.totalorder %s155, %s158
      %p167 = scmp.eq.s32.totalorder %s24, 3
      %p168 = por %p166, %p167
      %p169 = scmp.ne.s32.totalorder %s158, %s159
      %p170 = scmp.eq.s32.totalorder %s24, 0
      %p171 = por %p169, %p170
      %p172 = scmp.ne.s32.totalorder %s158, %s159
      %p173 = scmp.eq.s32.totalorder %s25, 3
      %p174 = por %p172, %p173
      %p176 = scmp.ne.s32.totalorder %s159, %s175
      %p177 = scmp.eq.s32.totalorder %s25, 0
      %p178 = por %p176, %p177
      %p179 = scmp.le.s32.totalorder 1, %s19
      %p180 = scmp.lt.s32.totalorder %s19, 5
      %p181 = pnand %p179, %p180
      %p182 = pneg %p181
      // Predicated region
      $region9: #{tpu_custom_call.1} parent=5 // pred_check
        _
      $region10: #{tpu_custom_call.1} parent=5 // pred_check_branch
        %184 = sbr.rel (%p181) target = $region12
      $region11: #{tpu_custom_call.1} parent=5 // pred_region
        %s185 = ssub.s32 %s19, 1
        // Predicated region
        $region13: #{tpu_custom_call.1} parent=11 // pred_check
          %p186 = pneg %p80
        $region14: #{tpu_custom_call.1} parent=11 // pred_check_branch
          %188 = sbr.rel (%p186) target = $region16
        $region15: #{tpu_custom_call.1} parent=11 // pred_region
          %s190 = ssub.s32 32, 32
          %191 = vsyncadd [#allocation6], %s190
          %s193 = sshll.u32 [#allocation5], 4
          %s194 = int_to_ptr.vmem [resolvable:$true] %s193
          %196 = dma.hbm_to_vmem [thread:$0]  %s1, 32, %s194, [#allocation6]
        $region16: #{tpu_custom_call.1} parent=11 // pred_fallthru
          _
        // Predicated region
        $region17: #{tpu_custom_call.1} parent=11 // pred_check
          %p197 = pneg %p101
        $region18: #{tpu_custom_call.1} parent=11 // pred_check_branch
          %199 = sbr.rel (%p197) target = $region20
        $region19: #{tpu_custom_call.1} parent=11 // pred_region
          %s201 = ssub.s32 32, 32
          %202 = vsyncadd [#allocation6], %s201
          %s204 = sshll.u32 [#allocation7], 4
          %s205 = int_to_ptr.vmem [resolvable:$true] %s204
          %207 = dma.hbm_to_vmem [thread:$0]  %s2, 32, %s205, [#allocation6]
        $region20: #{tpu_custom_call.1} parent=11 // pred_fallthru
          _
        // Predicated region
        $region21: #{tpu_custom_call.1} parent=11 // pred_check
          %p208 = pneg %p122
        $region22: #{tpu_custom_call.1} parent=11 // pred_check_branch
          %210 = sbr.rel (%p208) target = $region24
        $region23: #{tpu_custom_call.1} parent=11 // pred_region
          %s212 = ssub.s32 24576, 24576
          %213 = vsyncadd [#allocation9], %s212
          %s214 = sshll.u32 [#allocation8], 4
          %s215 = int_to_ptr.vmem [resolvable:$true] %s214
          %220 = dma.hbm_to_vmem [thread:$0]  %s3, 24576, %s215, [#allocation9], 768, 768, 48
        $region24: #{tpu_custom_call.1} parent=11 // pred_fallthru
          _
        // Predicated region
        $region25: #{tpu_custom_call.1} parent=11 // pred_check
          %p221 = pneg %p143
        $region26: #{tpu_custom_call.1} parent=11 // pred_check_branch
          %223 = sbr.rel (%p221) target = $region28
        $region27: #{tpu_custom_call.1} parent=11 // pred_region
          %s225 = ssub.s32 96, 96
          %226 = vsyncadd [#allocation9], %s225
          %s228 = sshll.u32 [#allocation10], 4
          %s229 = int_to_ptr.vmem [resolvable:$true] %s228
          %231 = dma.hbm_to_vmem [thread:$0]  %s4, 96, %s229, [#allocation9]
        $region28: #{tpu_custom_call.1} parent=11 // pred_fallthru
          _
      $region12: #{tpu_custom_call.1} parent=5 // pred_fallthru
        _
      %p232 = scmp.lt.s32.totalorder %s19, 4
      // Predicated region
      $region29: #{tpu_custom_call.1} parent=5 // pred_check
        %p233 = pneg %p232
      $region30: #{tpu_custom_call.1} parent=5 // pred_check_branch
        %235 = sbr.rel (%p233) target = $region32
      $region31: #{tpu_custom_call.1} parent=5 // pred_region
        // Predicated region
        $region33: #{tpu_custom_call.1} parent=31 // pred_check
          %p236 = pneg %p53
        $region34: #{tpu_custom_call.1} parent=31 // pred_check_branch
          %238 = sbr.rel (%p236) target = $region36
        $region35: #{tpu_custom_call.1} parent=31 // pred_region
          %s239 = sand.u32 %s43, 1
          %s240 = scalar_lea.sflag [#allocation3], %s239
          %s241 = sand.u32 %s43, 1
          %s242 = smul.addr %s241, 256
          %s243 = scalar_lea.vmem [#allocation2], %s242
          %s244 = smul.u32 16, %s27
          %s246 = ssub.s32 4096, 4096
          %247 = vsyncadd %s240, %s246
          %s248 = smul.addr %s244, 2
          %s249 = smul.addr %s26, 64
          %s250 = sadd.s32 %s248, %s249
          %s251 = smul.addr %s250, 128
          %s252 = scalar_lea.hbm %s0, %s251
          %s253 = sshll.u32 %s243, 4
          %s254 = int_to_ptr.vmem [resolvable:$true] %s253
          %259 = dma.hbm_to_vmem [thread:$0]  %s252, 4096, %s254, %s240, 256, 256, 16
        $region36: #{tpu_custom_call.1} parent=31 // pred_fallthru
          _
      $region32: #{tpu_custom_call.1} parent=5 // pred_fallthru
        _
      %p260 = scmp.le.s32.totalorder 1, %s19
      %p261 = scmp.lt.s32.totalorder %s19, 5
      %p262 = pnand %p260, %p261
      %p263 = pneg %p262
      // Predicated region
      $region37: #{tpu_custom_call.1} parent=5 // pred_check
        _
      $region38: #{tpu_custom_call.1} parent=5 // pred_check_branch
        %265 = sbr.rel (%p262) target = $region40
      $region39: #{tpu_custom_call.1} parent=5 // pred_region
        %s266 = ssub.s32 %s19, 1
        %s267 = sand.u32 %s46, 1
        %s268 = scalar_lea.sflag [#allocation3], %s267
        %s269 = sand.u32 %s46, 1
        %s270 = smul.addr %s269, 256
        %s271 = scalar_lea.vmem [#allocation2], %s270
        // Predicated region
        $region41: #{tpu_custom_call.1} parent=39 // pred_check
          %p272 = pneg %p59
        $region42: #{tpu_custom_call.1} parent=39 // pred_check_branch
          %274 = sbr.rel (%p272) target = $region44
        $region43: #{tpu_custom_call.1} parent=39 // pred_region
          %275 = dma.done %s268, 4096
        $region44: #{tpu_custom_call.1} parent=39 // pred_fallthru
          _
        // Predicated region
        $region45: #{tpu_custom_call.1} parent=39 // pred_check
          %p276 = pneg %p80
        $region46: #{tpu_custom_call.1} parent=39 // pred_check_branch
          %278 = sbr.rel (%p276) target = $region48
        $region47: #{tpu_custom_call.1} parent=39 // pred_region
          %279 = dma.done [#allocation6], 32
        $region48: #{tpu_custom_call.1} parent=39 // pred_fallthru
          _
        // Predicated region
        $region49: #{tpu_custom_call.1} parent=39 // pred_check
          %p280 = pneg %p101
        $region50: #{tpu_custom_call.1} parent=39 // pred_check_branch
          %282 = sbr.rel (%p280) target = $region52
        $region51: #{tpu_custom_call.1} parent=39 // pred_region
          %283 = dma.done [#allocation6], 32
        $region52: #{tpu_custom_call.1} parent=39 // pred_fallthru
          _
        // Predicated region
        $region53: #{tpu_custom_call.1} parent=39 // pred_check
          %p284 = pneg %p122
        $region54: #{tpu_custom_call.1} parent=39 // pred_check_branch
          %286 = sbr.rel (%p284) target = $region56
        $region55: #{tpu_custom_call.1} parent=39 // pred_region
          %287 = dma.done [#allocation9], 24576
        $region56: #{tpu_custom_call.1} parent=39 // pred_fallthru
          _
        // Predicated region
        $region57: #{tpu_custom_call.1} parent=39 // pred_check
          %p288 = pneg %p143
        $region58: #{tpu_custom_call.1} parent=39 // pred_check_branch
          %290 = sbr.rel (%p288) target = $region60
        $region59: #{tpu_custom_call.1} parent=39 // pred_region
          %291 = dma.done [#allocation9], 96
        $region60: #{tpu_custom_call.1} parent=39 // pred_fallthru
          _
        %s292 = sand.u32 %s46, 1
        %s293 = scalar_lea.sflag [#allocation3], %s292
        %s294 = sand.u32 %s46, 1
        %s295 = smul.addr %s294, 256
        %s296 = scalar_lea.vmem [#allocation2], %s295
        %p297 = pneg %p59
        %p298 = pneg %p56
        %p299 = pneg %p80
        %p300 = pneg %p77
        %p301 = pneg %p101
        %p302 = pneg %p98
        %p303 = pneg %p122
        %p304 = pneg %p119
        %p305 = pneg %p143
        %p306 = pneg %p140
        %p307 = pneg %p171
        %p308 = pneg %p168
        %s309 = sand.u32 %s158, 1
        %s310 = scalar_lea.sflag [#allocation4], %s309
        %s311 = sand.u32 %s158, 1
        %s312 = smul.addr %s311, 768
        %s313 = scalar_lea.vmem [#allocation11], %s312
        %s314 = smul.u32 16, %s29
        %s315 = smul.u32 16, %s29
        %v316 = vld [vmem:[%s271] sm:$0xff]
        %v317 = vld [vmem:[%s271 + $0x8] sm:$0xff]
        %v318 = vld [vmem:[%s271 + $0x10] sm:$0xff]
        %v319 = vld [vmem:[%s271 + $0x18] sm:$0xff]
        %v320 = vld [vmem:[%s271 + $0x20] sm:$0xff]
        %v321 = vld [vmem:[%s271 + $0x28] sm:$0xff]
        %v322 = vld [vmem:[%s271 + $0x30] sm:$0xff]
        %v323 = vld [vmem:[%s271 + $0x38] sm:$0xff]
        %v324 = vld [vmem:[%s271 + $0x40] sm:$0xff]
        %v325 = vld [vmem:[%s271 + $0x48] sm:$0xff]
        %v326 = vld [vmem:[%s271 + $0x50] sm:$0xff]
        %v327 = vld [vmem:[%s271 + $0x58] sm:$0xff]
        %v328 = vld [vmem:[%s271 + $0x60] sm:$0xff]
        %v329 = vld [vmem:[%s271 + $0x68] sm:$0xff]
        %v330 = vld [vmem:[%s271 + $0x70] sm:$0xff]
        %v331 = vld [vmem:[%s271 + $0x78] sm:$0xff]
        %v332 = vld [vmem:[%s271 + $0x80] sm:$0xff]
        %v333 = vld [vmem:[%s271 + $0x88] sm:$0xff]
        %v334 = vld [vmem:[%s271 + $0x90] sm:$0xff]
        %v335 = vld [vmem:[%s271 + $0x98] sm:$0xff]
        %v336 = vld [vmem:[%s271 + $0xa0] sm:$0xff]
        %v337 = vld [vmem:[%s271 + $0xa8] sm:$0xff]
        %v338 = vld [vmem:[%s271 + $0xb0] sm:$0xff]
        %v339 = vld [vmem:[%s271 + $0xb8] sm:$0xff]
        %v340 = vld [vmem:[%s271 + $0xc0] sm:$0xff]
        %v341 = vld [vmem:[%s271 + $0xc8] sm:$0xff]
        %v342 = vld [vmem:[%s271 + $0xd0] sm:$0xff]
        %v343 = vld [vmem:[%s271 + $0xd8] sm:$0xff]
        %v344 = vld [vmem:[%s271 + $0xe0] sm:$0xff]
        %v345 = vld [vmem:[%s271 + $0xe8] sm:$0xff]
        %v346 = vld [vmem:[%s271 + $0xf0] sm:$0xff]
        %v347 = vld [vmem:[%s271 + $0xf8] sm:$0xff]
        %v348 = vld [vmem:[#allocation5] sm:$0x3]
        %v349 = vld [vmem:[#allocation7] sm:$0x3]
        %v350 = vadd.f32 %v316, %v317
        %351 = vadd.xlane.f32.xlu0 %v350
        %v352 = vpop.xlane.xlu0 %351
        %v353 = vadd.f32 %v318, %v319
        %354 = vadd.xlane.f32.xlu0 %v353
        %v355 = vpop.xlane.xlu0 %354
        %v356 = vadd.f32 %v320, %v321
        %357 = vadd.xlane.f32.xlu0 %v356
        %v358 = vpop.xlane.xlu0 %357
        %v359 = vadd.f32 %v322, %v323
        %360 = vadd.xlane.f32.xlu0 %v359
        %v361 = vpop.xlane.xlu0 %360
        %v362 = vadd.f32 %v324, %v325
        %363 = vadd.xlane.f32.xlu0 %v362
        %v364 = vpop.xlane.xlu0 %363
        %v365 = vadd.f32 %v326, %v327
        %366 = vadd.xlane.f32.xlu0 %v365
        %v367 = vpop.xlane.xlu0 %366
        %v368 = vadd.f32 %v328, %v329
        %369 = vadd.xlane.f32.xlu0 %v368
        %v370 = vpop.xlane.xlu0 %369
        %v371 = vadd.f32 %v330, %v331
        %372 = vadd.xlane.f32.xlu0 %v371
        %v373 = vpop.xlane.xlu0 %372
        %v374 = vadd.f32 %v332, %v333
        %375 = vadd.xlane.f32.xlu0 %v374
        %v376 = vpop.xlane.xlu0 %375
        %v377 = vadd.f32 %v334, %v335
        %378 = vadd.xlane.f32.xlu0 %v377
        %v379 = vpop.xlane.xlu0 %378
        %v380 = vadd.f32 %v336, %v337
        %381 = vadd.xlane.f32.xlu0 %v380
        %v382 = vpop.xlane.xlu0 %381
        %v383 = vadd.f32 %v338, %v339
        %384 = vadd.xlane.f32.xlu0 %v383
        %v385 = vpop.xlane.xlu0 %384
        %v386 = vadd.f32 %v340, %v341
        %387 = vadd.xlane.f32.xlu0 %v386
        %v388 = vpop.xlane.xlu0 %387
        %v389 = vadd.f32 %v342, %v343
        %390 = vadd.xlane.f32.xlu0 %v389
        %v391 = vpop.xlane.xlu0 %390
        %v392 = vadd.f32 %v344, %v345
        %393 = vadd.xlane.f32.xlu0 %v392
        %v394 = vpop.xlane.xlu0 %393
        %v395 = vadd.f32 %v346, %v347
        %396 = vadd.xlane.f32.xlu0 %v395
        %v397 = vpop.xlane.xlu0 %396
        %v398 = vrcp.pop 256.0
        %v399 = vmul.f32 %v352, %v398
        %v400 = vmul.f32 %v355, %v398
        %v401 = vmul.f32 %v358, %v398
        %v402 = vmul.f32 %v361, %v398
        %v403 = vmul.f32 %v364, %v398
        %v404 = vmul.f32 %v367, %v398
        %v405 = vmul.f32 %v370, %v398
        %v406 = vmul.f32 %v373, %v398
        %v407 = vmul.f32 %v376, %v398
        %v408 = vmul.f32 %v379, %v398
        %v409 = vmul.f32 %v382, %v398
        %v410 = vmul.f32 %v385, %v398
        %v411 = vmul.f32 %v388, %v398
        %v412 = vmul.f32 %v391, %v398
        %v413 = vmul.f32 %v394, %v398
        %v414 = vmul.f32 %v397, %v398
        %v415 = vsub.f32 %v316, %v399
        %v416 = vsub.f32 %v317, %v399
        %v417 = vsub.f32 %v318, %v400
        %v418 = vsub.f32 %v319, %v400
        %v419 = vsub.f32 %v320, %v401
        %v420 = vsub.f32 %v321, %v401
        %v421 = vsub.f32 %v322, %v402
        %v422 = vsub.f32 %v323, %v402
        %v423 = vsub.f32 %v324, %v403
        %v424 = vsub.f32 %v325, %v403
        %v425 = vsub.f32 %v326, %v404
        %v426 = vsub.f32 %v327, %v404
        %v427 = vsub.f32 %v328, %v405
        %v428 = vsub.f32 %v329, %v405
        %v429 = vsub.f32 %v330, %v406
        %v430 = vsub.f32 %v331, %v406
        %v431 = vsub.f32 %v332, %v407
        %v432 = vsub.f32 %v333, %v407
        %v433 = vsub.f32 %v334, %v408
        %v434 = vsub.f32 %v335, %v408
        %v435 = vsub.f32 %v336, %v409
        %v436 = vsub.f32 %v337, %v409
        %v437 = vsub.f32 %v338, %v410
        %v438 = vsub.f32 %v339, %v410
        %v439 = vsub.f32 %v340, %v411
        %v440 = vsub.f32 %v341, %v411
        %v441 = vsub.f32 %v342, %v412
        %v442 = vsub.f32 %v343, %v412
        %v443 = vsub.f32 %v344, %v413
        %v444 = vsub.f32 %v345, %v413
        %v445 = vsub.f32 %v346, %v414
        %v446 = vsub.f32 %v347, %v414
        %v447 = vmul.f32 %v415, %v415
        %v448 = vmul.f32 %v416, %v416
        %v449 = vmul.f32 %v417, %v417
        %v450 = vmul.f32 %v418, %v418
        %v451 = vmul.f32 %v419, %v419
        %v452 = vmul.f32 %v420, %v420
        %v453 = vmul.f32 %v421, %v421
        %v454 = vmul.f32 %v422, %v422
        %v455 = vmul.f32 %v423, %v423
        %v456 = vmul.f32 %v424, %v424
        %v457 = vmul.f32 %v425, %v425
        %v458 = vmul.f32 %v426, %v426
        %v459 = vmul.f32 %v427, %v427
        %v460 = vmul.f32 %v428, %v428
        %v461 = vmul.f32 %v429, %v429
        %v462 = vmul.f32 %v430, %v430
        %v463 = vmul.f32 %v431, %v431
        %v464 = vmul.f32 %v432, %v432
        %v465 = vmul.f32 %v433, %v433
        %v466 = vmul.f32 %v434, %v434
        %v467 = vmul.f32 %v435, %v435
        %v468 = vmul.f32 %v436, %v436
        %v469 = vmul.f32 %v437, %v437
        %v470 = vmul.f32 %v438, %v438
        %v471 = vmul.f32 %v439, %v439
        %v472 = vmul.f32 %v440, %v440
        %v473 = vmul.f32 %v441, %v441
        %v474 = vmul.f32 %v442, %v442
        %v475 = vmul.f32 %v443, %v443
        %v476 = vmul.f32 %v444, %v444
        %v477 = vmul.f32 %v445, %v445
        %v478 = vmul.f32 %v446, %v446
        %v479 = vadd.f32 %v447, %v448
        %480 = vadd.xlane.f32.xlu0 %v479
        %v481 = vpop.xlane.xlu0 %480
        %v482 = vadd.f32 %v449, %v450
        %483 = vadd.xlane.f32.xlu0 %v482
        %v484 = vpop.xlane.xlu0 %483
        %v485 = vadd.f32 %v451, %v452
        %486 = vadd.xlane.f32.xlu0 %v485
        %v487 = vpop.xlane.xlu0 %486
        %v488 = vadd.f32 %v453, %v454
        %489 = vadd.xlane.f32.xlu0 %v488
        %v490 = vpop.xlane.xlu0 %489
        %v491 = vadd.f32 %v455, %v456
        %492 = vadd.xlane.f32.xlu0 %v491
        %v493 = vpop.xlane.xlu0 %492
        %v494 = vadd.f32 %v457, %v458
        %495 = vadd.xlane.f32.xlu0 %v494
        %v496 = vpop.xlane.xlu0 %495
        %v497 = vadd.f32 %v459, %v460
        %498 = vadd.xlane.f32.xlu0 %v497
        %v499 = vpop.xlane.xlu0 %498
        %v500 = vadd.f32 %v461, %v462
        %501 = vadd.xlane.f32.xlu0 %v500
        %v502 = vpop.xlane.xlu0 %501
        %v503 = vadd.f32 %v463, %v464
        %504 = vadd.xlane.f32.xlu0 %v503
        %v505 = vpop.xlane.xlu0 %504
        %v506 = vadd.f32 %v465, %v466
        %507 = vadd.xlane.f32.xlu0 %v506
        %v508 = vpop.xlane.xlu0 %507
        %v509 = vadd.f32 %v467, %v468
        %510 = vadd.xlane.f32.xlu0 %v509
        %v511 = vpop.xlane.xlu0 %510
        %v512 = vadd.f32 %v469, %v470
        %513 = vadd.xlane.f32.xlu0 %v512
        %v514 = vpop.xlane.xlu0 %513
        %v515 = vadd.f32 %v471, %v472
        %516 = vadd.xlane.f32.xlu0 %v515
        %v517 = vpop.xlane.xlu0 %516
        %v518 = vadd.f32 %v473, %v474
        %519 = vadd.xlane.f32.xlu0 %v518
        %v520 = vpop.xlane.xlu0 %519
        %v521 = vadd.f32 %v475, %v476
        %522 = vadd.xlane.f32.xlu0 %v521
        %v523 = vpop.xlane.xlu0 %522
        %v524 = vadd.f32 %v477, %v478
        %525 = vadd.xlane.f32.xlu0 %v524
        %v526 = vpop.xlane.xlu0 %525
        %v527 = vmul.f32 %v481, %v398
        %v528 = vmul.f32 %v484, %v398
        %v529 = vmul.f32 %v487, %v398
        %v530 = vmul.f32 %v490, %v398
        %v531 = vmul.f32 %v493, %v398
        %v532 = vmul.f32 %v496, %v398
        %v533 = vmul.f32 %v499, %v398
        %v534 = vmul.f32 %v502, %v398
        %v535 = vmul.f32 %v505, %v398
        %v536 = vmul.f32 %v508, %v398
        %v537 = vmul.f32 %v511, %v398
        %v538 = vmul.f32 %v514, %v398
        %v539 = vmul.f32 %v517, %v398
        %v540 = vmul.f32 %v520, %v398
        %v541 = vmul.f32 %v523, %v398
        %v542 = vmul.f32 %v526, %v398
        %v543 = vadd.f32 %v527, 1e-05
        %v544 = vadd.f32 %v528, 1e-05
        %v545 = vadd.f32 %v529, 1e-05
        %v546 = vadd.f32 %v530, 1e-05
        %v547 = vadd.f32 %v531, 1e-05
        %v548 = vadd.f32 %v532, 1e-05
        %v549 = vadd.f32 %v533, 1e-05
        %v550 = vadd.f32 %v534, 1e-05
        %v551 = vadd.f32 %v535, 1e-05
        %v552 = vadd.f32 %v536, 1e-05
        %v553 = vadd.f32 %v537, 1e-05
        %v554 = vadd.f32 %v538, 1e-05
        %v555 = vadd.f32 %v539, 1e-05
        %v556 = vadd.f32 %v540, 1e-05
        %v557 = vadd.f32 %v541, 1e-05
        %v558 = vadd.f32 %v542, 1e-05
        %v559 = vrsqrt.pop %v543
        %v560 = vrsqrt.pop %v544
        %v561 = vrsqrt.pop %v545
        %v562 = vrsqrt.pop %v546
        %v563 = vrsqrt.pop %v547
        %v564 = vrsqrt.pop %v548
        %v565 = vrsqrt.pop %v549
        %v566 = vrsqrt.pop %v550
        %v567 = vrsqrt.pop %v551
        %v568 = vrsqrt.pop %v552
        %v569 = vrsqrt.pop %v553
        %v570 = vrsqrt.pop %v554
        %v571 = vrsqrt.pop %v555
        %v572 = vrsqrt.pop %v556
        %v573 = vrsqrt.pop %v557
        %v574 = vrsqrt.pop %v558
        %v575 = vmul.f32 %v415, %v559
        %v576 = vmul.f32 %v416, %v559
        %v577 = vmul.f32 %v417, %v560
        %v578 = vmul.f32 %v418, %v560
        %v579 = vmul.f32 %v419, %v561
        %v580 = vmul.f32 %v420, %v561
        %v581 = vmul.f32 %v421, %v562
        %v582 = vmul.f32 %v422, %v562
        %v583 = vmul.f32 %v423, %v563
        %v584 = vmul.f32 %v424, %v563
        %v585 = vmul.f32 %v425, %v564
        %v586 = vmul.f32 %v426, %v564
        %v587 = vmul.f32 %v427, %v565
        %v588 = vmul.f32 %v428, %v565
        %v589 = vmul.f32 %v429, %v566
        %v590 = vmul.f32 %v430, %v566
        %v591 = vmul.f32 %v431, %v567
        %v592 = vmul.f32 %v432, %v567
        %v593 = vmul.f32 %v433, %v568
        %v594 = vmul.f32 %v434, %v568
        %v595 = vmul.f32 %v435, %v569
        %v596 = vmul.f32 %v436, %v569
        %v597 = vmul.f32 %v437, %v570
        %v598 = vmul.f32 %v438, %v570
        %v599 = vmul.f32 %v439, %v571
        %v600 = vmul.f32 %v440, %v571
        %v601 = vmul.f32 %v441, %v572
        %v602 = vmul.f32 %v442, %v572
        %v603 = vmul.f32 %v443, %v573
        %v604 = vmul.f32 %v444, %v573
        %v605 = vmul.f32 %v445, %v574
        %v606 = vmul.f32 %v446, %v574
        %v608 = vlaneseq
        %v609 = vshrl.u32 %v608, 7
        %v610 = vsub.s32 0, %v609
        %v611 = vrot.slane %v348, %v610
        %v612 = vlaneseq
        %v613 = vshrl.u32 %v612, 7
        %v614 = vsub.s32 1, %v613
        %v615 = vrot.slane %v348, %v614
        %v618 = vmul.f32 %v575, %v611
        %v619 = vmul.f32 %v576, %v615
        %v620 = vmul.f32 %v577, %v611
        %v621 = vmul.f32 %v578, %v615
        %v622 = vmul.f32 %v579, %v611
        %v623 = vmul.f32 %v580, %v615
        %v624 = vmul.f32 %v581, %v611
        %v625 = vmul.f32 %v582, %v615
        %v626 = vmul.f32 %v583, %v611
        %v627 = vmul.f32 %v584, %v615
        %v628 = vmul.f32 %v585, %v611
        %v629 = vmul.f32 %v586, %v615
        %v630 = vmul.f32 %v587, %v611
        %v631 = vmul.f32 %v588, %v615
        %v632 = vmul.f32 %v589, %v611
        %v633 = vmul.f32 %v590, %v615
        %v634 = vmul.f32 %v591, %v611
        %v635 = vmul.f32 %v592, %v615
        %v636 = vmul.f32 %v593, %v611
        %v637 = vmul.f32 %v594, %v615
        %v638 = vmul.f32 %v595, %v611
        %v639 = vmul.f32 %v596, %v615
        %v640 = vmul.f32 %v597, %v611
        %v641 = vmul.f32 %v598, %v615
        %v642 = vmul.f32 %v599, %v611
        %v643 = vmul.f32 %v600, %v615
        %v644 = vmul.f32 %v601, %v611
        %v645 = vmul.f32 %v602, %v615
        %v646 = vmul.f32 %v603, %v611
        %v647 = vmul.f32 %v604, %v615
        %v648 = vmul.f32 %v605, %v611
        %v649 = vmul.f32 %v606, %v615
        %v651 = vlaneseq
        %v652 = vshrl.u32 %v651, 7
        %v653 = vsub.s32 0, %v652
        %v654 = vrot.slane %v349, %v653
        %v655 = vlaneseq
        %v656 = vshrl.u32 %v655, 7
        %v657 = vsub.s32 1, %v656
        %v658 = vrot.slane %v349, %v657
        %v661 = vadd.f32 %v618, %v654
        %v662 = vadd.f32 %v619, %v658
        %v663 = vadd.f32 %v620, %v654
        %v664 = vadd.f32 %v621, %v658
        %v665 = vadd.f32 %v622, %v654
        %v666 = vadd.f32 %v623, %v658
        %v667 = vadd.f32 %v624, %v654
        %v668 = vadd.f32 %v625, %v658
        %v669 = vadd.f32 %v626, %v654
        %v670 = vadd.f32 %v627, %v658
        %v671 = vadd.f32 %v628, %v654
        %v672 = vadd.f32 %v629, %v658
        %v673 = vadd.f32 %v630, %v654
        %v674 = vadd.f32 %v631, %v658
        %v675 = vadd.f32 %v632, %v654
        %v676 = vadd.f32 %v633, %v658
        %v677 = vadd.f32 %v634, %v654
        %v678 = vadd.f32 %v635, %v658
        %v679 = vadd.f32 %v636, %v654
        %v680 = vadd.f32 %v637, %v658
        %v681 = vadd.f32 %v638, %v654
        %v682 = vadd.f32 %v639, %v658
        %v683 = vadd.f32 %v640, %v654
        %v684 = vadd.f32 %v641, %v658
        %v685 = vadd.f32 %v642, %v654
        %v686 = vadd.f32 %v643, %v658
        %v687 = vadd.f32 %v644, %v654
        %v688 = vadd.f32 %v645, %v658
        %v689 = vadd.f32 %v646, %v654
        %v690 = vadd.f32 %v647, %v658
        %v691 = vadd.f32 %v648, %v654
        %v692 = vadd.f32 %v649, %v658
        %v693 = vld [vmem:[#allocation8] sm:$0xff]
        %v694 = vld [vmem:[#allocation8 + $0x8] sm:$0xff]
        %v695 = vld [vmem:[#allocation8 + $0x10] sm:$0xff]
        %v696 = vld [vmem:[#allocation8 + $0x18] sm:$0xff]
        %v697 = vld [vmem:[#allocation8 + $0x20] sm:$0xff]
        %v698 = vld [vmem:[#allocation8 + $0x28] sm:$0xff]
        %v699 = vld [vmem:[#allocation8 + $0x30] sm:$0xff]
        %v700 = vld [vmem:[#allocation8 + $0x38] sm:$0xff]
        %v701 = vld [vmem:[#allocation8 + $0x40] sm:$0xff]
        %v702 = vld [vmem:[#allocation8 + $0x48] sm:$0xff]
        %v703 = vld [vmem:[#allocation8 + $0x50] sm:$0xff]
        %v704 = vld [vmem:[#allocation8 + $0x58] sm:$0xff]
        %v705 = vld [vmem:[#allocation8 + $0x60] sm:$0xff]
        %v706 = vld [vmem:[#allocation8 + $0x68] sm:$0xff]
        %v707 = vld [vmem:[#allocation8 + $0x70] sm:$0xff]
        %v708 = vld [vmem:[#allocation8 + $0x78] sm:$0xff]
        %v709 = vld [vmem:[#allocation8 + $0x80] sm:$0xff]
        %v710 = vld [vmem:[#allocation8 + $0x88] sm:$0xff]
        %v711 = vld [vmem:[#allocation8 + $0x90] sm:$0xff]
        %v712 = vld [vmem:[#allocation8 + $0x98] sm:$0xff]
        %v713 = vld [vmem:[#allocation8 + $0xa0] sm:$0xff]
        %v714 = vld [vmem:[#allocation8 + $0xa8] sm:$0xff]
        %v715 = vld [vmem:[#allocation8 + $0xb0] sm:$0xff]
        %v716 = vld [vmem:[#allocation8 + $0xb8] sm:$0xff]
        %v717 = vld [vmem:[#allocation8 + $0xc0] sm:$0xff]
        %v718 = vld [vmem:[#allocation8 + $0xc8] sm:$0xff]
        %v719 = vld [vmem:[#allocation8 + $0xd0] sm:$0xff]
        %v720 = vld [vmem:[#allocation8 + $0xd8] sm:$0xff]
        %v721 = vld [vmem:[#allocation8 + $0xe0] sm:$0xff]
        %v722 = vld [vmem:[#allocation8 + $0xe8] sm:$0xff]
        %v723 = vld [vmem:[#allocation8 + $0xf0] sm:$0xff]
        %v724 = vld [vmem:[#allocation8 + $0xf8] sm:$0xff]
        %v725 = vld [vmem:[#allocation8 + $0x100] sm:$0xff]
        %v726 = vld [vmem:[#allocation8 + $0x108] sm:$0xff]
        %v727 = vld [vmem:[#allocation8 + $0x110] sm:$0xff]
        %v728 = vld [vmem:[#allocation8 + $0x118] sm:$0xff]
        %v729 = vld [vmem:[#allocation8 + $0x120] sm:$0xff]
        %v730 = vld [vmem:[#allocation8 + $0x128] sm:$0xff]
        %v731 = vld [vmem:[#allocation8 + $0x130] sm:$0xff]
        %v732 = vld [vmem:[#allocation8 + $0x138] sm:$0xff]
        %v733 = vld [vmem:[#allocation8 + $0x140] sm:$0xff]
        %v734 = vld [vmem:[#allocation8 + $0x148] sm:$0xff]
        %v735 = vld [vmem:[#allocation8 + $0x150] sm:$0xff]
        %v736 = vld [vmem:[#allocation8 + $0x158] sm:$0xff]
        %v737 = vld [vmem:[#allocation8 + $0x160] sm:$0xff]
        %v738 = vld [vmem:[#allocation8 + $0x168] sm:$0xff]
        %v739 = vld [vmem:[#allocation8 + $0x170] sm:$0xff]
        %v740 = vld [vmem:[#allocation8 + $0x178] sm:$0xff]
        %v741 = vld [vmem:[#allocation8 + $0x180] sm:$0xff]
        %v742 = vld [vmem:[#allocation8 + $0x188] sm:$0xff]
        %v743 = vld [vmem:[#allocation8 + $0x190] sm:$0xff]
        %v744 = vld [vmem:[#allocation8 + $0x198] sm:$0xff]
        %v745 = vld [vmem:[#allocation8 + $0x1a0] sm:$0xff]
        %v746 = vld [vmem:[#allocation8 + $0x1a8] sm:$0xff]
        %v747 = vld [vmem:[#allocation8 + $0x1b0] sm:$0xff]
        %v748 = vld [vmem:[#allocation8 + $0x1b8] sm:$0xff]
        %v749 = vld [vmem:[#allocation8 + $0x1c0] sm:$0xff]
        %v750 = vld [vmem:[#allocation8 + $0x1c8] sm:$0xff]
        %v751 = vld [vmem:[#allocation8 + $0x1d0] sm:$0xff]
        %v752 = vld [vmem:[#allocation8 + $0x1d8] sm:$0xff]
        %v753 = vld [vmem:[#allocation8 + $0x1e0] sm:$0xff]
        %v754 = vld [vmem:[#allocation8 + $0x1e8] sm:$0xff]
        %v755 = vld [vmem:[#allocation8 + $0x1f0] sm:$0xff]
        %v756 = vld [vmem:[#allocation8 + $0x1f8] sm:$0xff]
        %v757 = vld [vmem:[#allocation8 + $0x200] sm:$0xff]
        %v758 = vld [vmem:[#allocation8 + $0x208] sm:$0xff]
        %v759 = vld [vmem:[#allocation8 + $0x210] sm:$0xff]
        %v760 = vld [vmem:[#allocation8 + $0x218] sm:$0xff]
        %v761 = vld [vmem:[#allocation8 + $0x220] sm:$0xff]
        %v762 = vld [vmem:[#allocation8 + $0x228] sm:$0xff]
        %v763 = vld [vmem:[#allocation8 + $0x230] sm:$0xff]
        %v764 = vld [vmem:[#allocation8 + $0x238] sm:$0xff]
        %v765 = vld [vmem:[#allocation8 + $0x240] sm:$0xff]
        %v766 = vld [vmem:[#allocation8 + $0x248] sm:$0xff]
        %v767 = vld [vmem:[#allocation8 + $0x250] sm:$0xff]
        %v768 = vld [vmem:[#allocation8 + $0x258] sm:$0xff]
        %v769 = vld [vmem:[#allocation8 + $0x260] sm:$0xff]
        %v770 = vld [vmem:[#allocation8 + $0x268] sm:$0xff]
        %v771 = vld [vmem:[#allocation8 + $0x270] sm:$0xff]
        %v772 = vld [vmem:[#allocation8 + $0x278] sm:$0xff]
        %v773 = vld [vmem:[#allocation8 + $0x280] sm:$0xff]
        %v774 = vld [vmem:[#allocation8 + $0x288] sm:$0xff]
        %v775 = vld [vmem:[#allocation8 + $0x290] sm:$0xff]
        %v776 = vld [vmem:[#allocation8 + $0x298] sm:$0xff]
        %v777 = vld [vmem:[#allocation8 + $0x2a0] sm:$0xff]
        %v778 = vld [vmem:[#allocation8 + $0x2a8] sm:$0xff]
        %v779 = vld [vmem:[#allocation8 + $0x2b0] sm:$0xff]
        %v780 = vld [vmem:[#allocation8 + $0x2b8] sm:$0xff]
        %v781 = vld [vmem:[#allocation8 + $0x2c0] sm:$0xff]
        %v782 = vld [vmem:[#allocation8 + $0x2c8] sm:$0xff]
        %v783 = vld [vmem:[#allocation8 + $0x2d0] sm:$0xff]
        %v784 = vld [vmem:[#allocation8 + $0x2d8] sm:$0xff]
        %v785 = vld [vmem:[#allocation8 + $0x2e0] sm:$0xff]
        %v786 = vld [vmem:[#allocation8 + $0x2e8] sm:$0xff]
        %v787 = vld [vmem:[#allocation8 + $0x2f0] sm:$0xff]
        %v788 = vld [vmem:[#allocation8 + $0x2f8] sm:$0xff]
        %v789 = vld [vmem:[#allocation8 + $0x300] sm:$0xff]
        %v790 = vld [vmem:[#allocation8 + $0x308] sm:$0xff]
        %v791 = vld [vmem:[#allocation8 + $0x310] sm:$0xff]
        %v792 = vld [vmem:[#allocation8 + $0x318] sm:$0xff]
        %v793 = vld [vmem:[#allocation8 + $0x320] sm:$0xff]
        %v794 = vld [vmem:[#allocation8 + $0x328] sm:$0xff]
        %v795 = vld [vmem:[#allocation8 + $0x330] sm:$0xff]
        %v796 = vld [vmem:[#allocation8 + $0x338] sm:$0xff]
        %v797 = vld [vmem:[#allocation8 + $0x340] sm:$0xff]
        %v798 = vld [vmem:[#allocation8 + $0x348] sm:$0xff]
        %v799 = vld [vmem:[#allocation8 + $0x350] sm:$0xff]
        %v800 = vld [vmem:[#allocation8 + $0x358] sm:$0xff]
        %v801 = vld [vmem:[#allocation8 + $0x360] sm:$0xff]
        %v802 = vld [vmem:[#allocation8 + $0x368] sm:$0xff]
        %v803 = vld [vmem:[#allocation8 + $0x370] sm:$0xff]
        %v804 = vld [vmem:[#allocation8 + $0x378] sm:$0xff]
        %v805 = vld [vmem:[#allocation8 + $0x380] sm:$0xff]
        %v806 = vld [vmem:[#allocation8 + $0x388] sm:$0xff]
        %v807 = vld [vmem:[#allocation8 + $0x390] sm:$0xff]
        %v808 = vld [vmem:[#allocation8 + $0x398] sm:$0xff]
        %v809 = vld [vmem:[#allocation8 + $0x3a0] sm:$0xff]
        %v810 = vld [vmem:[#allocation8 + $0x3a8] sm:$0xff]
        %v811 = vld [vmem:[#allocation8 + $0x3b0] sm:$0xff]
        %v812 = vld [vmem:[#allocation8 + $0x3b8] sm:$0xff]
        %v813 = vld [vmem:[#allocation8 + $0x3c0] sm:$0xff]
        %v814 = vld [vmem:[#allocation8 + $0x3c8] sm:$0xff]
        %v815 = vld [vmem:[#allocation8 + $0x3d0] sm:$0xff]
        %v816 = vld [vmem:[#allocation8 + $0x3d8] sm:$0xff]
        %v817 = vld [vmem:[#allocation8 + $0x3e0] sm:$0xff]
        %v818 = vld [vmem:[#allocation8 + $0x3e8] sm:$0xff]
        %v819 = vld [vmem:[#allocation8 + $0x3f0] sm:$0xff]
        %v820 = vld [vmem:[#allocation8 + $0x3f8] sm:$0xff]
        %v821 = vld [vmem:[#allocation8 + $0x400] sm:$0xff]
        %v822 = vld [vmem:[#allocation8 + $0x408] sm:$0xff]
        %v823 = vld [vmem:[#allocation8 + $0x410] sm:$0xff]
        %v824 = vld [vmem:[#allocation8 + $0x418] sm:$0xff]
        %v825 = vld [vmem:[#allocation8 + $0x420] sm:$0xff]
        %v826 = vld [vmem:[#allocation8 + $0x428] sm:$0xff]
        %v827 = vld [vmem:[#allocation8 + $0x430] sm:$0xff]
        %v828 = vld [vmem:[#allocation8 + $0x438] sm:$0xff]
        %v829 = vld [vmem:[#allocation8 + $0x440] sm:$0xff]
        %v830 = vld [vmem:[#allocation8 + $0x448] sm:$0xff]
        %v831 = vld [vmem:[#allocation8 + $0x450] sm:$0xff]
        %v832 = vld [vmem:[#allocation8 + $0x458] sm:$0xff]
        %v833 = vld [vmem:[#allocation8 + $0x460] sm:$0xff]
        %v834 = vld [vmem:[#allocation8 + $0x468] sm:$0xff]
        %v835 = vld [vmem:[#allocation8 + $0x470] sm:$0xff]
        %v836 = vld [vmem:[#allocation8 + $0x478] sm:$0xff]
        %v837 = vld [vmem:[#allocation8 + $0x480] sm:$0xff]
        %v838 = vld [vmem:[#allocation8 + $0x488] sm:$0xff]
        %v839 = vld [vmem:[#allocation8 + $0x490] sm:$0xff]
        %v840 = vld [vmem:[#allocation8 + $0x498] sm:$0xff]
        %v841 = vld [vmem:[#allocation8 + $0x4a0] sm:$0xff]
        %v842 = vld [vmem:[#allocation8 + $0x4a8] sm:$0xff]
        %v843 = vld [vmem:[#allocation8 + $0x4b0] sm:$0xff]
        %v844 = vld [vmem:[#allocation8 + $0x4b8] sm:$0xff]
        %v845 = vld [vmem:[#allocation8 + $0x4c0] sm:$0xff]
        %v846 = vld [vmem:[#allocation8 + $0x4c8] sm:$0xff]
        %v847 = vld [vmem:[#allocation8 + $0x4d0] sm:$0xff]
        %v848 = vld [vmem:[#allocation8 + $0x4d8] sm:$0xff]
        %v849 = vld [vmem:[#allocation8 + $0x4e0] sm:$0xff]
        %v850 = vld [vmem:[#allocation8 + $0x4e8] sm:$0xff]
        %v851 = vld [vmem:[#allocation8 + $0x4f0] sm:$0xff]
        %v852 = vld [vmem:[#allocation8 + $0x4f8] sm:$0xff]
        %v853 = vld [vmem:[#allocation8 + $0x500] sm:$0xff]
        %v854 = vld [vmem:[#allocation8 + $0x508] sm:$0xff]
        %v855 = vld [vmem:[#allocation8 + $0x510] sm:$0xff]
        %v856 = vld [vmem:[#allocation8 + $0x518] sm:$0xff]
        %v857 = vld [vmem:[#allocation8 + $0x520] sm:$0xff]
        %v858 = vld [vmem:[#allocation8 + $0x528] sm:$0xff]
        %v859 = vld [vmem:[#allocation8 + $0x530] sm:$0xff]
        %v860 = vld [vmem:[#allocation8 + $0x538] sm:$0xff]
        %v861 = vld [vmem:[#allocation8 + $0x540] sm:$0xff]
        %v862 = vld [vmem:[#allocation8 + $0x548] sm:$0xff]
        %v863 = vld [vmem:[#allocation8 + $0x550] sm:$0xff]
        %v864 = vld [vmem:[#allocation8 + $0x558] sm:$0xff]
        %v865 = vld [vmem:[#allocation8 + $0x560] sm:$0xff]
        %v866 = vld [vmem:[#allocation8 + $0x568] sm:$0xff]
        %v867 = vld [vmem:[#allocation8 + $0x570] sm:$0xff]
        %v868 = vld [vmem:[#allocation8 + $0x578] sm:$0xff]
        %v869 = vld [vmem:[#allocation8 + $0x580] sm:$0xff]
        %v870 = vld [vmem:[#allocation8 + $0x588] sm:$0xff]
        %v871 = vld [vmem:[#allocation8 + $0x590] sm:$0xff]
        %v872 = vld [vmem:[#allocation8 + $0x598] sm:$0xff]
        %v873 = vld [vmem:[#allocation8 + $0x5a0] sm:$0xff]
        %v874 = vld [vmem:[#allocation8 + $0x5a8] sm:$0xff]
        %v875 = vld [vmem:[#allocation8 + $0x5b0] sm:$0xff]
        %v876 = vld [vmem:[#allocation8 + $0x5b8] sm:$0xff]
        %v877 = vld [vmem:[#allocation8 + $0x5c0] sm:$0xff]
        %v878 = vld [vmem:[#allocation8 + $0x5c8] sm:$0xff]
        %v879 = vld [vmem:[#allocation8 + $0x5d0] sm:$0xff]
        %v880 = vld [vmem:[#allocation8 + $0x5d8] sm:$0xff]
        %v881 = vld [vmem:[#allocation8 + $0x5e0] sm:$0xff]
        %v882 = vld [vmem:[#allocation8 + $0x5e8] sm:$0xff]
        %v883 = vld [vmem:[#allocation8 + $0x5f0] sm:$0xff]
        %v884 = vld [vmem:[#allocation8 + $0x5f8] sm:$0xff]
        %v885 = vld [vmem:[#allocation10] sm:$0x3f]
        %v887 = vlaneseq
        %v888 = vshrl.u32 %v887, 7
        %v889 = vsub.s32 0, %v888
        %v890 = vrot.slane %v885, %v889
        %v891 = vlaneseq
        %v892 = vshrl.u32 %v891, 7
        %v893 = vsub.s32 1, %v892
        %v894 = vrot.slane %v885, %v893
        %v895 = vlaneseq
        %v896 = vshrl.u32 %v895, 7
        %v897 = vsub.s32 2, %v896
        %v898 = vrot.slane %v885, %v897
        %v899 = vlaneseq
        %v900 = vshrl.u32 %v899, 7
        %v901 = vsub.s32 3, %v900
        %v902 = vrot.slane %v885, %v901
        %v903 = vlaneseq
        %v904 = vshrl.u32 %v903, 7
        %v905 = vsub.s32 4, %v904
        %v906 = vrot.slane %v885, %v905
        %v907 = vlaneseq
        %v908 = vshrl.u32 %v907, 7
        %v909 = vsub.s32 5, %v908
        %v910 = vrot.slane %v885, %v909
        %917 = vmatprep.subr.mxu0 %v694
        %918 = vmatpush1.msra.mxu0 %v693
        %919 = vmatprep.subr.mxu0 %v700
        %920 = vmatpush1.msra.mxu0 %v699
        %921 = vmatprep.subr.mxu0 %v706
        %922 = vmatpush1.msra.mxu0 %v705
        %923 = vmatprep.subr.mxu0 %v712
        %924 = vmatpush1.msra.mxu0 %v711
        %925 = vmatprep.subr.mxu0 %v718
        %926 = vmatpush1.msra.mxu0 %v717
        %927 = vmatprep.subr.mxu0 %v724
        %928 = vmatpush1.msra.mxu0 %v723
        %929 = vmatprep.subr.mxu0 %v730
        %930 = vmatpush1.msra.mxu0 %v729
        %931 = vmatprep.subr.mxu0 %v736
        %932 = vmatpush1.msra.mxu0 %v735
        %933 = vmatprep.subr.mxu0 %v742
        %934 = vmatpush1.msra.mxu0 %v741
        %935 = vmatprep.subr.mxu0 %v748
        %936 = vmatpush1.msra.mxu0 %v747
        %937 = vmatprep.subr.mxu0 %v754
        %938 = vmatpush1.msra.mxu0 %v753
        %939 = vmatprep.subr.mxu0 %v760
        %940 = vmatpush1.msra.mxu0 %v759
        %941 = vmatprep.subr.mxu0 %v766
        %942 = vmatpush1.msra.mxu0 %v765
        %943 = vmatprep.subr.mxu0 %v772
        %944 = vmatpush1.msra.mxu0 %v771
        %945 = vmatprep.subr.mxu0 %v778
        %946 = vmatpush1.msra.mxu0 %v777
        %947 = vmatprep.subr.mxu0 %v784
        %948 = vmatpush1.msra.mxu0 %v783
        %949 = vmatprep.subr.mxu0 %v790
        %950 = vmatpush1.msra.mxu0 %v789
        %951 = vmatprep.subr.mxu0 %v796
        %952 = vmatpush1.msra.mxu0 %v795
        %953 = vmatprep.subr.mxu0 %v802
        %954 = vmatpush1.msra.mxu0 %v801
        %955 = vmatprep.subr.mxu0 %v808
        %956 = vmatpush1.msra.mxu0 %v807
        %957 = vmatprep.subr.mxu0 %v814
        %958 = vmatpush1.msra.mxu0 %v813
        %959 = vmatprep.subr.mxu0 %v820
        %960 = vmatpush1.msra.mxu0 %v819
        %961 = vmatprep.subr.mxu0 %v826
        %962 = vmatpush1.msra.mxu0 %v825
        %963 = vmatprep.subr.mxu0 %v832
        %964 = vmatpush1.msra.mxu0 %v831
        %965 = vmatprep.subr.mxu0 %v838
        %966 = vmatpush1.msra.mxu0 %v837
        %967 = vmatprep.subr.mxu0 %v844
        %968 = vmatpush1.msra.mxu0 %v843
        %969 = vmatprep.subr.mxu0 %v850
        %970 = vmatpush1.msra.mxu0 %v849
        %971 = vmatprep.subr.mxu0 %v856
        %972 = vmatpush1.msra.mxu0 %v855
        %973 = vmatprep.subr.mxu0 %v862
        %974 = vmatpush1.msra.mxu0 %v861
        %975 = vmatprep.subr.mxu0 %v868
        %976 = vmatpush1.msra.mxu0 %v867
        %977 = vmatprep.subr.mxu0 %v874
        %978 = vmatpush1.msra.mxu0 %v873
        %979 = vmatprep.subr.mxu0 %v880
        %980 = vmatpush1.msra.mxu0 %v879
        %981 = vmatprep.mubr.f32.mxu0 %v662
        %982 = vmatmul.mubr.f32.gmra.mrb[0].mxu0 %v661
        %v983 = vpop.f32.mrb[0].mxu0
        %v984 = vadd.f32 %v890, %v983
        %v985 = vpop.f32.mrb[0].mxu0
        %v986 = vadd.f32 %v894, %v985
        %987 = vmatprep.mubr.f32.mxu0 %v664
        %988 = vmatmul.mubr.f32.gmra.mrb[0].mxu0 %v663
        %v989 = vpop.f32.mrb[0].mxu0
        %v990 = vadd.f32 %v890, %v989
        %v991 = vpop.f32.mrb[0].mxu0
        %v992 = vadd.f32 %v894, %v991
        %993 = vmatprep.mubr.f32.mxu0 %v666
        %994 = vmatmul.mubr.f32.gmra.mrb[0].mxu0 %v665
        %v995 = vpop.f32.mrb[0].mxu0
        %v996 = vadd.f32 %v890, %v995
        %v997 = vpop.f32.mrb[0].mxu0
        %v998 = vadd.f32 %v894, %v997
        %999 = vmatprep.mubr.f32.mxu0 %v668
        %1000 = vmatmul.mubr.f32.gmra.mrb[0].mxu0 %v667
        %v1001 = vpop.f32.mrb[0].mxu0
        %v1002 = vadd.f32 %v890, %v1001
        %v1003 = vpop.f32.mrb[0].mxu0
        %v1004 = vadd.f32 %v894, %v1003
        %1005 = vmatprep.mubr.f32.mxu0 %v670
        %1006 = vmatmul.mubr.f32.gmra.mrb[0].mxu0 %v669
        %v1007 = vpop.f32.mrb[0].mxu0
        %v1008 = vadd.f32 %v890, %v1007
        %v1009 = vpop.f32.mrb[0].mxu0
        %v1010 = vadd.f32 %v894, %v1009
        %1011 = vmatprep.mubr.f32.mxu0 %v672
        %1012 = vmatmul.mubr.f32.gmra.mrb[0].mxu0 %v671
        %v1013 = vpop.f32.mrb[0].mxu0
        %v1014 = vadd.f32 %v890, %v1013
        %v1015 = vpop.f32.mrb[0].mxu0
        %v1016 = vadd.f32 %v894, %v1015
        %1017 = vmatprep.mubr.f32.mxu0 %v674
        %1018 = vmatmul.mubr.f32.gmra.mrb[0].mxu0 %v673
        %v1019 = vpop.f32.mrb[0].mxu0
        %v1020 = vadd.f32 %v890, %v1019
        %v1021 = vpop.f32.mrb[0].mxu0
        %v1022 = vadd.f32 %v894, %v1021
        %1023 = vmatprep.mubr.f32.mxu0 %v676
        %1024 = vmatmul.mubr.f32.gmra.mrb[0].mxu0 %v675
        %v1025 = vpop.f32.mrb[0].mxu0
        %v1026 = vadd.f32 %v890, %v1025
        %v1027 = vpop.f32.mrb[0].mxu0
        %v1028 = vadd.f32 %v894, %v1027
        %1029 = vmatprep.mubr.f32.mxu0 %v678
        %1030 = vmatmul.mubr.f32.gmra.mrb[0].mxu0 %v677
        %v1031 = vpop.f32.mrb[0].mxu0
        %v1032 = vadd.f32 %v890, %v1031
        %v1033 = vpop.f32.mrb[0].mxu0
        %v1034 = vadd.f32 %v894, %v1033
        %1035 = vmatprep.mubr.f32.mxu0 %v680
        %1036 = vmatmul.mubr.f32.gmra.mrb[0].mxu0 %v679
        %v1037 = vpop.f32.mrb[0].mxu0
        %v1038 = vadd.f32 %v890, %v1037
        %v1039 = vpop.f32.mrb[0].mxu0
        %v1040 = vadd.f32 %v894, %v1039
        %1041 = vmatprep.mubr.f32.mxu0 %v682
        %1042 = vmatmul.mubr.f32.gmra.mrb[0].mxu0 %v681
        %v1043 = vpop.f32.mrb[0].mxu0
        %v1044 = vadd.f32 %v890, %v1043
        %v1045 = vpop.f32.mrb[0].mxu0
        %v1046 = vadd.f32 %v894, %v1045
        %1047 = vmatprep.mubr.f32.mxu0 %v684
        %1048 = vmatmul.mubr.f32.gmra.mrb[0].mxu0 %v683
        %v1049 = vpop.f32.mrb[0].mxu0
        %v1050 = vadd.f32 %v890, %v1049
        %v1051 = vpop.f32.mrb[0].mxu0
        %v1052 = vadd.f32 %v894, %v1051
        %1053 = vmatprep.mubr.f32.mxu0 %v686
        %1054 = vmatmul.mubr.f32.gmra.mrb[0].mxu0 %v685
        %v1055 = vpop.f32.mrb[0].mxu0
        %v1056 = vadd.f32 %v890, %v1055
        %v1057 = vpop.f32.mrb[0].mxu0
        %v1058 = vadd.f32 %v894, %v1057
        %1059 = vmatprep.mubr.f32.mxu0 %v688
        %1060 = vmatmul.mubr.f32.gmra.mrb[0].mxu0 %v687
        %v1061 = vpop.f32.mrb[0].mxu0
        %v1062 = vadd.f32 %v890, %v1061
        %v1063 = vpop.f32.mrb[0].mxu0
        %v1064 = vadd.f32 %v894, %v1063
        %1065 = vmatprep.mubr.f32.mxu0 %v690
        %1066 = vmatmul.mubr.f32.gmra.mrb[0].mxu0 %v689
        %v1067 = vpop.f32.mrb[0].mxu0
        %v1068 = vadd.f32 %v890, %v1067
        %v1069 = vpop.f32.mrb[0].mxu0
        %v1070 = vadd.f32 %v894, %v1069
        %1071 = vmatprep.mubr.f32.mxu0 %v692
        %1072 = vmatmul.mubr.f32.gmra.mrb[0].mxu0 %v691
        %v1073 = vpop.f32.mrb[0].mxu0
        %v1074 = vadd.f32 %v890, %v1073
        %v1075 = vpop.f32.mrb[0].mxu0
        %v1076 = vadd.f32 %v894, %v1075
        %1077 = vdwg.mxu0
        %1078 = vmatprep.subr.mxu0 %v696
        %1079 = vmatpush1.msra.mxu0 %v695
        %1080 = vmatprep.subr.mxu0 %v702
        %1081 = vmatpush1.msra.mxu0 %v701
        %1082 = vmatprep.subr.mxu0 %v708
        %1083 = vmatpush1.msra.mxu0 %v707
        %1084 = vmatprep.subr.mxu0 %v714
        %1085 = vmatpush1.msra.mxu0 %v713
        %1086 = vmatprep.subr.mxu0 %v720
        %1087 = vmatpush1.msra.mxu0 %v719
        %1088 = vmatprep.subr.mxu0 %v726
        %1089 = vmatpush1.msra.mxu0 %v725
        %1090 = vmatprep.subr.mxu0 %v732
        %1091 = vmatpush1.msra.mxu0 %v731
        %1092 = vmatprep.subr.mxu0 %v738
        %1093 = vmatpush1.msra.mxu0 %v737
        %1094 = vmatprep.subr.mxu0 %v744
        %1095 = vmatpush1.msra.mxu0 %v743
        %1096 = vmatprep.subr.mxu0 %v750
        %1097 = vmatpush1.msra.mxu0 %v749
        %1098 = vmatprep.subr.mxu0 %v756
        %1099 = vmatpush1.msra.mxu0 %v755
        %1100 = vmatprep.subr.mxu0 %v762
        %1101 = vmatpush1.msra.mxu0 %v761
        %1102 = vmatprep.subr.mxu0 %v768
        %1103 = vmatpush1.msra.mxu0 %v767
        %1104 = vmatprep.subr.mxu0 %v774
        %1105 = vmatpush1.msra.mxu0 %v773
        %1106 = vmatprep.subr.mxu0 %v780
        %1107 = vmatpush1.msra.mxu0 %v779
        %1108 = vmatprep.subr.mxu0 %v786
        %1109 = vmatpush1.msra.mxu0 %v785
        %1110 = vmatprep.subr.mxu0 %v792
        %1111 = vmatpush1.msra.mxu0 %v791
        %1112 = vmatprep.subr.mxu0 %v798
        %1113 = vmatpush1.msra.mxu0 %v797
        %1114 = vmatprep.subr.mxu0 %v804
        %1115 = vmatpush1.msra.mxu0 %v803
        %1116 = vmatprep.subr.mxu0 %v810
        %1117 = vmatpush1.msra.mxu0 %v809
        %1118 = vmatprep.subr.mxu0 %v816
        %1119 = vmatpush1.msra.mxu0 %v815
        %1120 = vmatprep.subr.mxu0 %v822
        %1121 = vmatpush1.msra.mxu0 %v821
        %1122 = vmatprep.subr.mxu0 %v828
        %1123 = vmatpush1.msra.mxu0 %v827
        %1124 = vmatprep.subr.mxu0 %v834
        %1125 = vmatpush1.msra.mxu0 %v833
        %1126 = vmatprep.subr.mxu0 %v840
        %1127 = vmatpush1.msra.mxu0 %v839
        %1128 = vmatprep.subr.mxu0 %v846
        %1129 = vmatpush1.msra.mxu0 %v845
        %1130 = vmatprep.subr.mxu0 %v852
        %1131 = vmatpush1.msra.mxu0 %v851
        %1132 = vmatprep.subr.mxu0 %v858
        %1133 = vmatpush1.msra.mxu0 %v857
        %1134 = vmatprep.subr.mxu0 %v864
        %1135 = vmatpush1.msra.mxu0 %v863
        %1136 = vmatprep.subr.mxu0 %v870
        %1137 = vmatpush1.msra.mxu0 %v869
        %1138 = vmatprep.subr.mxu0 %v876
        %1139 = vmatpush1.msra.mxu0 %v875
        %1140 = vmatprep.subr.mxu0 %v882
        %1141 = vmatpush1.msra.mxu0 %v881
        %1142 = vmatprep.mubr.f32.mxu0 %v662
        %1143 = vmatmul.mubr.f32.gmra.mrb[0].mxu0 %v661
        %v1144 = vpop.f32.mrb[0].mxu0
        %v1145 = vadd.f32 %v898, %v1144
        %v1146 = vpop.f32.mrb[0].mxu0
        %v1147 = vadd.f32 %v902, %v1146
        %1148 = vmatprep.mubr.f32.mxu0 %v664
        %1149 = vmatmul.mubr.f32.gmra.mrb[0].mxu0 %v663
        %v1150 = vpop.f32.mrb[0].mxu0
        %v1151 = vadd.f32 %v898, %v1150
        %v1152 = vpop.f32.mrb[0].mxu0
        %v1153 = vadd.f32 %v902, %v1152
        %1154 = vmatprep.mubr.f32.mxu0 %v666
        %1155 = vmatmul.mubr.f32.gmra.mrb[0].mxu0 %v665
        %v1156 = vpop.f32.mrb[0].mxu0
        %v1157 = vadd.f32 %v898, %v1156
        %v1158 = vpop.f32.mrb[0].mxu0
        %v1159 = vadd.f32 %v902, %v1158
        %1160 = vmatprep.mubr.f32.mxu0 %v668
        %1161 = vmatmul.mubr.f32.gmra.mrb[0].mxu0 %v667
        %v1162 = vpop.f32.mrb[0].mxu0
        %v1163 = vadd.f32 %v898, %v1162
        %v1164 = vpop.f32.mrb[0].mxu0
        %v1165 = vadd.f32 %v902, %v1164
        %1166 = vmatprep.mubr.f32.mxu0 %v670
        %1167 = vmatmul.mubr.f32.gmra.mrb[0].mxu0 %v669
        %v1168 = vpop.f32.mrb[0].mxu0
        %v1169 = vadd.f32 %v898, %v1168
        %v1170 = vpop.f32.mrb[0].mxu0
        %v1171 = vadd.f32 %v902, %v1170
        %1172 = vmatprep.mubr.f32.mxu0 %v672
        %1173 = vmatmul.mubr.f32.gmra.mrb[0].mxu0 %v671
        %v1174 = vpop.f32.mrb[0].mxu0
        %v1175 = vadd.f32 %v898, %v1174
        %v1176 = vpop.f32.mrb[0].mxu0
        %v1177 = vadd.f32 %v902, %v1176
        %1178 = vmatprep.mubr.f32.mxu0 %v674
        %1179 = vmatmul.mubr.f32.gmra.mrb[0].mxu0 %v673
        %v1180 = vpop.f32.mrb[0].mxu0
        %v1181 = vadd.f32 %v898, %v1180
        %v1182 = vpop.f32.mrb[0].mxu0
        %v1183 = vadd.f32 %v902, %v1182
        %1184 = vmatprep.mubr.f32.mxu0 %v676
        %1185 = vmatmul.mubr.f32.gmra.mrb[0].mxu0 %v675
        %v1186 = vpop.f32.mrb[0].mxu0
        %v1187 = vadd.f32 %v898, %v1186
        %v1188 = vpop.f32.mrb[0].mxu0
        %v1189 = vadd.f32 %v902, %v1188
        %1190 = vmatprep.mubr.f32.mxu0 %v678
        %1191 = vmatmul.mubr.f32.gmra.mrb[0].mxu0 %v677
        %v1192 = vpop.f32.mrb[0].mxu0
        %v1193 = vadd.f32 %v898, %v1192
        %v1194 = vpop.f32.mrb[0].mxu0
        %v1195 = vadd.f32 %v902, %v1194
        %1196 = vmatprep.mubr.f32.mxu0 %v680
        %1197 = vmatmul.mubr.f32.gmra.mrb[0].mxu0 %v679
        %v1198 = vpop.f32.mrb[0].mxu0
        %v1199 = vadd.f32 %v898, %v1198
        %v1200 = vpop.f32.mrb[0].mxu0
        %v1201 = vadd.f32 %v902, %v1200
        %1202 = vmatprep.mubr.f32.mxu0 %v682
        %1203 = vmatmul.mubr.f32.gmra.mrb[0].mxu0 %v681
        %v1204 = vpop.f32.mrb[0].mxu0
        %v1205 = vadd.f32 %v898, %v1204
        %v1206 = vpop.f32.mrb[0].mxu0
        %v1207 = vadd.f32 %v902, %v1206
        %1208 = vmatprep.mubr.f32.mxu0 %v684
        %1209 = vmatmul.mubr.f32.gmra.mrb[0].mxu0 %v683
        %v1210 = vpop.f32.mrb[0].mxu0
        %v1211 = vadd.f32 %v898, %v1210
        %v1212 = vpop.f32.mrb[0].mxu0
        %v1213 = vadd.f32 %v902, %v1212
        %1214 = vmatprep.mubr.f32.mxu0 %v686
        %1215 = vmatmul.mubr.f32.gmra.mrb[0].mxu0 %v685
        %v1216 = vpop.f32.mrb[0].mxu0
        %v1217 = vadd.f32 %v898, %v1216
        %v1218 = vpop.f32.mrb[0].mxu0
        %v1219 = vadd.f32 %v902, %v1218
        %1220 = vmatprep.mubr.f32.mxu0 %v688
        %1221 = vmatmul.mubr.f32.gmra.mrb[0].mxu0 %v687
        %v1222 = vpop.f32.mrb[0].mxu0
        %v1223 = vadd.f32 %v898, %v1222
        %v1224 = vpop.f32.mrb[0].mxu0
        %v1225 = vadd.f32 %v902, %v1224
        %1226 = vmatprep.mubr.f32.mxu0 %v690
        %1227 = vmatmul.mubr.f32.gmra.mrb[0].mxu0 %v689
        %v1228 = vpop.f32.mrb[0].mxu0
        %v1229 = vadd.f32 %v898, %v1228
        %v1230 = vpop.f32.mrb[0].mxu0
        %v1231 = vadd.f32 %v902, %v1230
        %1232 = vmatprep.mubr.f32.mxu0 %v692
        %1233 = vmatmul.mubr.f32.gmra.mrb[0].mxu0 %v691
        %v1234 = vpop.f32.mrb[0].mxu0
        %v1235 = vadd.f32 %v898, %v1234
        %v1236 = vpop.f32.mrb[0].mxu0
        %v1237 = vadd.f32 %v902, %v1236
        %1238 = vdwg.mxu0
        %1239 = vmatprep.subr.mxu0 %v698
        %1240 = vmatpush1.msra.mxu0 %v697
        %1241 = vmatprep.subr.mxu0 %v704
        %1242 = vmatpush1.msra.mxu0 %v703
        %1243 = vmatprep.subr.mxu0 %v710
        %1244 = vmatpush1.msra.mxu0 %v709
        %1245 = vmatprep.subr.mxu0 %v716
        %1246 = vmatpush1.msra.mxu0 %v715
        %1247 = vmatprep.subr.mxu0 %v722
        %1248 = vmatpush1.msra.mxu0 %v721
        %1249 = vmatprep.subr.mxu0 %v728
        %1250 = vmatpush1.msra.mxu0 %v727
        %1251 = vmatprep.subr.mxu0 %v734
        %1252 = vmatpush1.msra.mxu0 %v733
        %1253 = vmatprep.subr.mxu0 %v740
        %1254 = vmatpush1.msra.mxu0 %v739
        %1255 = vmatprep.subr.mxu0 %v746
        %1256 = vmatpush1.msra.mxu0 %v745
        %1257 = vmatprep.subr.mxu0 %v752
        %1258 = vmatpush1.msra.mxu0 %v751
        %1259 = vmatprep.subr.mxu0 %v758
        %1260 = vmatpush1.msra.mxu0 %v757
        %1261 = vmatprep.subr.mxu0 %v764
        %1262 = vmatpush1.msra.mxu0 %v763
        %1263 = vmatprep.subr.mxu0 %v770
        %1264 = vmatpush1.msra.mxu0 %v769
        %1265 = vmatprep.subr.mxu0 %v776
        %1266 = vmatpush1.msra.mxu0 %v775
        %1267 = vmatprep.subr.mxu0 %v782
        %1268 = vmatpush1.msra.mxu0 %v781
        %1269 = vmatprep.subr.mxu0 %v788
        %1270 = vmatpush1.msra.mxu0 %v787
        %1271 = vmatprep.subr.mxu0 %v794
        %1272 = vmatpush1.msra.mxu0 %v793
        %1273 = vmatprep.subr.mxu0 %v800
        %1274 = vmatpush1.msra.mxu0 %v799
        %1275 = vmatprep.subr.mxu0 %v806
        %1276 = vmatpush1.msra.mxu0 %v805
        %1277 = vmatprep.subr.mxu0 %v812
        %1278 = vmatpush1.msra.mxu0 %v811
        %1279 = vmatprep.subr.mxu0 %v818
        %1280 = vmatpush1.msra.mxu0 %v817
        %1281 = vmatprep.subr.mxu0 %v824
        %1282 = vmatpush1.msra.mxu0 %v823
        %1283 = vmatprep.subr.mxu0 %v830
        %1284 = vmatpush1.msra.mxu0 %v829
        %1285 = vmatprep.subr.mxu0 %v836
        %1286 = vmatpush1.msra.mxu0 %v835
        %1287 = vmatprep.subr.mxu0 %v842
        %1288 = vmatpush1.msra.mxu0 %v841
        %1289 = vmatprep.subr.mxu0 %v848
        %1290 = vmatpush1.msra.mxu0 %v847
        %1291 = vmatprep.subr.mxu0 %v854
        %1292 = vmatpush1.msra.mxu0 %v853
        %1293 = vmatprep.subr.mxu0 %v860
        %1294 = vmatpush1.msra.mxu0 %v859
        %1295 = vmatprep.subr.mxu0 %v866
        %1296 = vmatpush1.msra.mxu0 %v865
        %1297 = vmatprep.subr.mxu0 %v872
        %1298 = vmatpush1.msra.mxu0 %v871
        %1299 = vmatprep.subr.mxu0 %v878
        %1300 = vmatpush1.msra.mxu0 %v877
        %1301 = vmatprep.subr.mxu0 %v884
        %1302 = vmatpush1.msra.mxu0 %v883
        %1303 = vmatprep.mubr.f32.mxu0 %v662
        %1304 = vmatmul.mubr.f32.gmra.mrb[0].mxu0 %v661
        %v1305 = vpop.f32.mrb[0].mxu0
        %v1306 = vadd.f32 %v906, %v1305
        %v1307 = vpop.f32.mrb[0].mxu0
        %v1308 = vadd.f32 %v910, %v1307
        %1309 = vmatprep.mubr.f32.mxu0 %v664
        %1310 = vmatmul.mubr.f32.gmra.mrb[0].mxu0 %v663
        %v1311 = vpop.f32.mrb[0].mxu0
        %v1312 = vadd.f32 %v906, %v1311
        %v1313 = vpop.f32.mrb[0].mxu0
        %v1314 = vadd.f32 %v910, %v1313
        %1315 = vmatprep.mubr.f32.mxu0 %v666
        %1316 = vmatmul.mubr.f32.gmra.mrb[0].mxu0 %v665
        %v1317 = vpop.f32.mrb[0].mxu0
        %v1318 = vadd.f32 %v906, %v1317
        %v1319 = vpop.f32.mrb[0].mxu0
        %v1320 = vadd.f32 %v910, %v1319
        %1321 = vmatprep.mubr.f32.mxu0 %v668
        %1322 = vmatmul.mubr.f32.gmra.mrb[0].mxu0 %v667
        %v1323 = vpop.f32.mrb[0].mxu0
        %v1324 = vadd.f32 %v906, %v1323
        %v1325 = vpop.f32.mrb[0].mxu0
        %v1326 = vadd.f32 %v910, %v1325
        %1327 = vmatprep.mubr.f32.mxu0 %v670
        %1328 = vmatmul.mubr.f32.gmra.mrb[0].mxu0 %v669
        %v1329 = vpop.f32.mrb[0].mxu0
        %v1330 = vadd.f32 %v906, %v1329
        %v1331 = vpop.f32.mrb[0].mxu0
        %v1332 = vadd.f32 %v910, %v1331
        %1333 = vmatprep.mubr.f32.mxu0 %v672
        %1334 = vmatmul.mubr.f32.gmra.mrb[0].mxu0 %v671
        %v1335 = vpop.f32.mrb[0].mxu0
        %v1336 = vadd.f32 %v906, %v1335
        %v1337 = vpop.f32.mrb[0].mxu0
        %v1338 = vadd.f32 %v910, %v1337
        %1339 = vmatprep.mubr.f32.mxu0 %v674
        %1340 = vmatmul.mubr.f32.gmra.mrb[0].mxu0 %v673
        %v1341 = vpop.f32.mrb[0].mxu0
        %v1342 = vadd.f32 %v906, %v1341
        %v1343 = vpop.f32.mrb[0].mxu0
        %v1344 = vadd.f32 %v910, %v1343
        %1345 = vmatprep.mubr.f32.mxu0 %v676
        %1346 = vmatmul.mubr.f32.gmra.mrb[0].mxu0 %v675
        %v1347 = vpop.f32.mrb[0].mxu0
        %v1348 = vadd.f32 %v906, %v1347
        %v1349 = vpop.f32.mrb[0].mxu0
        %v1350 = vadd.f32 %v910, %v1349
        %1351 = vmatprep.mubr.f32.mxu0 %v678
        %1352 = vmatmul.mubr.f32.gmra.mrb[0].mxu0 %v677
        %v1353 = vpop.f32.mrb[0].mxu0
        %v1354 = vadd.f32 %v906, %v1353
        %v1355 = vpop.f32.mrb[0].mxu0
        %v1356 = vadd.f32 %v910, %v1355
        %1357 = vmatprep.mubr.f32.mxu0 %v680
        %1358 = vmatmul.mubr.f32.gmra.mrb[0].mxu0 %v679
        %v1359 = vpop.f32.mrb[0].mxu0
        %v1360 = vadd.f32 %v906, %v1359
        %v1361 = vpop.f32.mrb[0].mxu0
        %v1362 = vadd.f32 %v910, %v1361
        %1363 = vmatprep.mubr.f32.mxu0 %v682
        %1364 = vmatmul.mubr.f32.gmra.mrb[0].mxu0 %v681
        %v1365 = vpop.f32.mrb[0].mxu0
        %v1366 = vadd.f32 %v906, %v1365
        %v1367 = vpop.f32.mrb[0].mxu0
        %v1368 = vadd.f32 %v910, %v1367
        %1369 = vmatprep.mubr.f32.mxu0 %v684
        %1370 = vmatmul.mubr.f32.gmra.mrb[0].mxu0 %v683
        %v1371 = vpop.f32.mrb[0].mxu0
        %v1372 = vadd.f32 %v906, %v1371
        %v1373 = vpop.f32.mrb[0].mxu0
        %v1374 = vadd.f32 %v910, %v1373
        %1375 = vmatprep.mubr.f32.mxu0 %v686
        %1376 = vmatmul.mubr.f32.gmra.mrb[0].mxu0 %v685
        %v1377 = vpop.f32.mrb[0].mxu0
        %v1378 = vadd.f32 %v906, %v1377
        %v1379 = vpop.f32.mrb[0].mxu0
        %v1380 = vadd.f32 %v910, %v1379
        %1381 = vmatprep.mubr.f32.mxu0 %v688
        %1382 = vmatmul.mubr.f32.gmra.mrb[0].mxu0 %v687
        %v1383 = vpop.f32.mrb[0].mxu0
        %v1384 = vadd.f32 %v906, %v1383
        %v1385 = vpop.f32.mrb[0].mxu0
        %v1386 = vadd.f32 %v910, %v1385
        %1387 = vmatprep.mubr.f32.mxu0 %v690
        %1388 = vmatmul.mubr.f32.gmra.mrb[0].mxu0 %v689
        %v1389 = vpop.f32.mrb[0].mxu0
        %v1390 = vadd.f32 %v906, %v1389
        %v1391 = vpop.f32.mrb[0].mxu0
        %v1392 = vadd.f32 %v910, %v1391
        %1393 = vmatprep.mubr.f32.mxu0 %v692
        %1394 = vmatmul.mubr.f32.gmra.mrb[0].mxu0 %v691
        %v1395 = vpop.f32.mrb[0].mxu0
        %v1396 = vadd.f32 %v906, %v1395
        %v1397 = vpop.f32.mrb[0].mxu0
        %v1398 = vadd.f32 %v910, %v1397
        %1399 = vdwg.mxu0
        %1400 = vst [vmem:[%s313] sm:$0xff] %v984
        %1401 = vst [vmem:[%s313 + $0x8] sm:$0xff] %v986
        %1402 = vst [vmem:[%s313 + $0x10] sm:$0xff] %v1145
        %1403 = vst [vmem:[%s313 + $0x18] sm:$0xff] %v1147
        %1404 = vst [vmem:[%s313 + $0x20] sm:$0xff] %v1306
        %1405 = vst [vmem:[%s313 + $0x28] sm:$0xff] %v1308
        %1406 = vst [vmem:[%s313 + $0x30] sm:$0xff] %v990
        %1407 = vst [vmem:[%s313 + $0x38] sm:$0xff] %v992
        %1408 = vst [vmem:[%s313 + $0x40] sm:$0xff] %v1151
        %1409 = vst [vmem:[%s313 + $0x48] sm:$0xff] %v1153
        %1410 = vst [vmem:[%s313 + $0x50] sm:$0xff] %v1312
        %1411 = vst [vmem:[%s313 + $0x58] sm:$0xff] %v1314
        %1412 = vst [vmem:[%s313 + $0x60] sm:$0xff] %v996
        %1413 = vst [vmem:[%s313 + $0x68] sm:$0xff] %v998
        %1414 = vst [vmem:[%s313 + $0x70] sm:$0xff] %v1157
        %1415 = vst [vmem:[%s313 + $0x78] sm:$0xff] %v1159
        %1416 = vst [vmem:[%s313 + $0x80] sm:$0xff] %v1318
        %1417 = vst [vmem:[%s313 + $0x88] sm:$0xff] %v1320
        %1418 = vst [vmem:[%s313 + $0x90] sm:$0xff] %v1002
        %1419 = vst [vmem:[%s313 + $0x98] sm:$0xff] %v1004
        %1420 = vst [vmem:[%s313 + $0xa0] sm:$0xff] %v1163
        %1421 = vst [vmem:[%s313 + $0xa8] sm:$0xff] %v1165
        %1422 = vst [vmem:[%s313 + $0xb0] sm:$0xff] %v1324
        %1423 = vst [vmem:[%s313 + $0xb8] sm:$0xff] %v1326
        %1424 = vst [vmem:[%s313 + $0xc0] sm:$0xff] %v1008
        %1425 = vst [vmem:[%s313 + $0xc8] sm:$0xff] %v1010
        %1426 = vst [vmem:[%s313 + $0xd0] sm:$0xff] %v1169
        %1427 = vst [vmem:[%s313 + $0xd8] sm:$0xff] %v1171
        %1428 = vst [vmem:[%s313 + $0xe0] sm:$0xff] %v1330
        %1429 = vst [vmem:[%s313 + $0xe8] sm:$0xff] %v1332
        %1430 = vst [vmem:[%s313 + $0xf0] sm:$0xff] %v1014
        %1431 = vst [vmem:[%s313 + $0xf8] sm:$0xff] %v1016
        %1432 = vst [vmem:[%s313 + $0x100] sm:$0xff] %v1175
        %1433 = vst [vmem:[%s313 + $0x108] sm:$0xff] %v1177
        %1434 = vst [vmem:[%s313 + $0x110] sm:$0xff] %v1336
        %1435 = vst [vmem:[%s313 + $0x118] sm:$0xff] %v1338
        %1436 = vst [vmem:[%s313 + $0x120] sm:$0xff] %v1020
        %1437 = vst [vmem:[%s313 + $0x128] sm:$0xff] %v1022
        %1438 = vst [vmem:[%s313 + $0x130] sm:$0xff] %v1181
        %1439 = vst [vmem:[%s313 + $0x138] sm:$0xff] %v1183
        %1440 = vst [vmem:[%s313 + $0x140] sm:$0xff] %v1342
        %1441 = vst [vmem:[%s313 + $0x148] sm:$0xff] %v1344
        %1442 = vst [vmem:[%s313 + $0x150] sm:$0xff] %v1026
        %1443 = vst [vmem:[%s313 + $0x158] sm:$0xff] %v1028
        %1444 = vst [vmem:[%s313 + $0x160] sm:$0xff] %v1187
        %1445 = vst [vmem:[%s313 + $0x168] sm:$0xff] %v1189
        %1446 = vst [vmem:[%s313 + $0x170] sm:$0xff] %v1348
        %1447 = vst [vmem:[%s313 + $0x178] sm:$0xff] %v1350
        %1448 = vst [vmem:[%s313 + $0x180] sm:$0xff] %v1032
        %1449 = vst [vmem:[%s313 + $0x188] sm:$0xff] %v1034
        %1450 = vst [vmem:[%s313 + $0x190] sm:$0xff] %v1193
        %1451 = vst [vmem:[%s313 + $0x198] sm:$0xff] %v1195
        %1452 = vst [vmem:[%s313 + $0x1a0] sm:$0xff] %v1354
        %1453 = vst [vmem:[%s313 + $0x1a8] sm:$0xff] %v1356
        %1454 = vst [vmem:[%s313 + $0x1b0] sm:$0xff] %v1038
        %1455 = vst [vmem:[%s313 + $0x1b8] sm:$0xff] %v1040
        %1456 = vst [vmem:[%s313 + $0x1c0] sm:$0xff] %v1199
        %1457 = vst [vmem:[%s313 + $0x1c8] sm:$0xff] %v1201
        %1458 = vst [vmem:[%s313 + $0x1d0] sm:$0xff] %v1360
        %1459 = vst [vmem:[%s313 + $0x1d8] sm:$0xff] %v1362
        %1460 = vst [vmem:[%s313 + $0x1e0] sm:$0xff] %v1044
        %1461 = vst [vmem:[%s313 + $0x1e8] sm:$0xff] %v1046
        %1462 = vst [vmem:[%s313 + $0x1f0] sm:$0xff] %v1205
        %1463 = vst [vmem:[%s313 + $0x1f8] sm:$0xff] %v1207
        %1464 = vst [vmem:[%s313 + $0x200] sm:$0xff] %v1366
        %1465 = vst [vmem:[%s313 + $0x208] sm:$0xff] %v1368
        %1466 = vst [vmem:[%s313 + $0x210] sm:$0xff] %v1050
        %1467 = vst [vmem:[%s313 + $0x218] sm:$0xff] %v1052
        %1468 = vst [vmem:[%s313 + $0x220] sm:$0xff] %v1211
        %1469 = vst [vmem:[%s313 + $0x228] sm:$0xff] %v1213
        %1470 = vst [vmem:[%s313 + $0x230] sm:$0xff] %v1372
        %1471 = vst [vmem:[%s313 + $0x238] sm:$0xff] %v1374
        %1472 = vst [vmem:[%s313 + $0x240] sm:$0xff] %v1056
        %1473 = vst [vmem:[%s313 + $0x248] sm:$0xff] %v1058
        %1474 = vst [vmem:[%s313 + $0x250] sm:$0xff] %v1217
        %1475 = vst [vmem:[%s313 + $0x258] sm:$0xff] %v1219
        %1476 = vst [vmem:[%s313 + $0x260] sm:$0xff] %v1378
        %1477 = vst [vmem:[%s313 + $0x268] sm:$0xff] %v1380
        %1478 = vst [vmem:[%s313 + $0x270] sm:$0xff] %v1062
        %1479 = vst [vmem:[%s313 + $0x278] sm:$0xff] %v1064
        %1480 = vst [vmem:[%s313 + $0x280] sm:$0xff] %v1223
        %1481 = vst [vmem:[%s313 + $0x288] sm:$0xff] %v1225
        %1482 = vst [vmem:[%s313 + $0x290] sm:$0xff] %v1384
        %1483 = vst [vmem:[%s313 + $0x298] sm:$0xff] %v1386
        %1484 = vst [vmem:[%s313 + $0x2a0] sm:$0xff] %v1068
        %1485 = vst [vmem:[%s313 + $0x2a8] sm:$0xff] %v1070
        %1486 = vst [vmem:[%s313 + $0x2b0] sm:$0xff] %v1229
        %1487 = vst [vmem:[%s313 + $0x2b8] sm:$0xff] %v1231
        %1488 = vst [vmem:[%s313 + $0x2c0] sm:$0xff] %v1390
        %1489 = vst [vmem:[%s313 + $0x2c8] sm:$0xff] %v1392
        %1490 = vst [vmem:[%s313 + $0x2d0] sm:$0xff] %v1074
        %1491 = vst [vmem:[%s313 + $0x2d8] sm:$0xff] %v1076
        %1492 = vst [vmem:[%s313 + $0x2e0] sm:$0xff] %v1235
        %1493 = vst [vmem:[%s313 + $0x2e8] sm:$0xff] %v1237
        %1494 = vst [vmem:[%s313 + $0x2f0] sm:$0xff] %v1396
        %1495 = vst [vmem:[%s313 + $0x2f8] sm:$0xff] %v1398
        %s1496 = sand.u32 %s158, 1
        %s1497 = scalar_lea.sflag [#allocation4], %s1496
        %s1498 = sand.u32 %s158, 1
        %s1499 = smul.addr %s1498, 768
        %s1500 = scalar_lea.vmem [#allocation11], %s1499
        // Predicated region
        $region61: #{tpu_custom_call.1} parent=39 // pred_check
          %p1501 = pneg %p168
        $region62: #{tpu_custom_call.1} parent=39 // pred_check_branch
          %1503 = sbr.rel (%p1501) target = $region64
        $region63: #{tpu_custom_call.1} parent=39 // pred_region
          %s1504 = smul.u32 16, %s29
          %s1506 = ssub.s32 12288, 12288
          %1507 = vsyncadd %s1497, %s1506
          %s1508 = smul.addr %s1504, 6
          %s1509 = smul.addr %s28, 192
          %s1510 = sadd.s32 %s1508, %s1509
          %s1511 = smul.addr %s1510, 128
          %s1512 = scalar_lea.hbm %s5, %s1511
          %s1513 = sshll.u32 %s1500, 4
          %s1514 = int_to_ptr.vmem [resolvable:$true] %s1513
          %1519 = dma.vmem_to_hbm [thread:$0]  %s1514, 12288, %s1512, %s1497, 768, 768, 48
        $region64: #{tpu_custom_call.1} parent=39 // pred_fallthru
          _
      $region40: #{tpu_custom_call.1} parent=5 // pred_fallthru
        _
      %p1520 = scmp.le.s32.totalorder 2, %s19
      // Predicated region
      $region65: #{tpu_custom_call.1} parent=5 // pred_check
        %p1521 = pneg %p1520
      $region66: #{tpu_custom_call.1} parent=5 // pred_check_branch
        %1523 = sbr.rel (%p1521) target = $region68
      $region67: #{tpu_custom_call.1} parent=5 // pred_region
        %s1524 = ssub.s32 %s19, 2
        // Predicated region
        $region69: #{tpu_custom_call.1} parent=67 // pred_check
          %p1525 = pneg %p174
        $region70: #{tpu_custom_call.1} parent=67 // pred_check_branch
          %1527 = sbr.rel (%p1525) target = $region72
        $region71: #{tpu_custom_call.1} parent=67 // pred_region
          %s1528 = sand.u32 %s159, 1
          %s1529 = scalar_lea.sflag [#allocation4], %s1528
          %s1530 = sand.u32 %s159, 1
          %s1531 = smul.addr %s1530, 768
          %s1532 = scalar_lea.vmem [#allocation11], %s1531
          %1533 = dma.done %s1529, 12288
        $region72: #{tpu_custom_call.1} parent=67 // pred_fallthru
          _
      $region68: #{tpu_custom_call.1} parent=5 // pred_fallthru
        _
    $region6: #{tpu_custom_call.1} parent=1 // loop_footer
      %s23 = sadd.s32 1, %s19
    $region7: #{tpu_custom_call.1} parent=1 // loop_footer_branch
      %18 = sbr.rel target = $region3
    $region8: #{tpu_custom_call.1} parent=1 // loop_exit
      _
    %1534 = vsyncpa [#allocation3], 1
    %s1535 = scalar_lea.sflag [#allocation3], 1
    %1536 = vsyncpa %s1535, 1
    %1537 = vsyncpa [#allocation6], 1
    %1538 = vsyncpa [#allocation9], 1
    %1539 = vsyncpa [#allocation4], 1
    %s1540 = scalar_lea.sflag [#allocation4], 1
    %1541 = vsyncpa %s1540, 1

</llo_original>
